<compile_context>
chip_gen: v7x
topology: tpu7x:2x2x1
jax: 0.10.0
libtpu: 0.0.40
codegen_flags: <defaults>
</compile_context>

<pallas_src>
import functools

import jax
import jax.numpy as jnp
from jax import lax
from jax.experimental import pallas as pl
from jax.experimental.pallas import tpu as pltpu

EPS = 1e-5  # nn.LayerNorm default eps


def _patch_merge_kernel(x_ref, w_ref, b_ref, o_ref):
    """Fused 2x2 gather + LayerNorm(4C) + Linear(4C -> 2C, no bias).

    x_ref: (tr, 2, W2, 2C)  tr row pairs; axis 1 = h parity.
                            even-h lanes = [x0 | x2], odd-h lanes = [x1 | x3]
    w_ref: (2, 2C, 2Cout)   gamma-folded reduction weight, per parity stream
    b_ref: (1, 2Cout)       beta @ W^T (f32)
    o_ref: (tr*W2, 2Cout)
    """
    f32 = jnp.float32
    x = x_ref[...]
    xe = x[:, 0].astype(f32)          # (tr, W2, 2C) -- free slice of a lead dim
    xo = x[:, 1].astype(f32)
    tr, w2, c2 = xe.shape
    inv_n = 1.0 / (2.0 * c2)          # 1 / (4C)

    # One-pass LayerNorm statistics over the merged 4C features.
    s = jnp.sum(xe, axis=-1, keepdims=True) + jnp.sum(xo, axis=-1, keepdims=True)
    ss = (jnp.sum(xe * xe, axis=-1, keepdims=True)
          + jnp.sum(xo * xo, axis=-1, keepdims=True))
    mean = s * inv_n
    var = jnp.maximum(ss * inv_n - mean * mean, 0.0)   # biased, as nn.LayerNorm
    rstd = lax.rsqrt(var + EPS)

    # gamma/beta are folded into w_ref / b_ref -> only normalize + cast here.
    ye = ((xe - mean) * rstd).astype(w_ref.dtype).reshape(tr * w2, c2)
    yo = ((xo - mean) * rstd).astype(w_ref.dtype).reshape(tr * w2, c2)
    # TODO(synk): when W2 % 8 != 0 (e.g. Swin stages with W2 = 28/14/7) the two
    # reshapes above cross the (8,128) sublane tiling and cost a VMEM relayout
    # of the (already matmul-dtype) activations; a rank-3 contraction would
    # avoid it once Mosaic supports it directly.

    acc = jnp.dot(ye, w_ref[0], preferred_element_type=f32,
                  precision=lax.Precision.HIGHEST)
    acc = acc + jnp.dot(yo, w_ref[1], preferred_element_type=f32,
                        precision=lax.Precision.HIGHEST)
    acc = acc + b_ref[...].astype(f32)
    o_ref[...] = acc.astype(o_ref.dtype)   # (tr*W2, 2Cout): no output reshape


def _vmem_capacity_bytes():
    """Per-TensorCore VMEM capacity; conservative fallback if unavailable."""
    try:
        info = pltpu.get_tpu_info()
        cap = getattr(info, "vmem_capacity_bytes", None)
        if cap:
            return int(cap)
    except Exception:
        pass
    return 64 << 20  # v7x-class (most restrictive)


def _choose_tile(R, W2, c4, itemsize, target_block_bytes, min_grid_steps=4):
    """Pick tr = number of (even,odd) row pairs per grid step.

    Constraints:
      * block bytes (tr * W2 * 4C * itemsize) ~<= target_block_bytes
      * grid has >= min_grid_steps steps when R allows (pipelining / megacore)
      * (tr * W2) % 8 == 0 or tr == R   (sublane tiling of the output block)
    Prefers a divisor of R (exact grid); otherwise a cdiv grid with a ragged
    last block (masked by Pallas) -- NO jnp.pad / extra HBM pass.
    """
    bytes_per_pair = max(1, W2 * c4 * itemsize)
    max_tr = max(1, int(target_block_bytes) // bytes_per_pair)
    if R >= min_grid_steps:
        max_tr = min(max_tr, R // min_grid_steps)
    max_tr = max(1, min(max_tr, R))

    def aligned(t):
        return (t * W2) % 8 == 0 or t == R

    best_div = 0
    best_any = 0
    for cand in range(1, max_tr + 1):
        if aligned(cand):
            best_any = cand
            if R % cand == 0:
                best_div = cand
    if best_div and (best_any == 0 or 2 * best_div >= best_any):
        return best_div              # exact grid, block not much smaller
    if best_any:
        return best_any              # cdiv grid, ragged tail masked by Pallas
    return R                         # degenerate tiny/odd case: one full block


@functools.partial(jax.jit,
                   static_argnames=("input_resolution", "time_dim", "matmul_dtype"))
def patch_merge_forward(x, gamma, beta, w_reduction, *, input_resolution,
                        time_dim=1, matmul_dtype=jnp.bfloat16):
    """Forward pass of PatchMerge.

    x:           (B, T*H*W, C)
    gamma, beta: (4*C,)          LayerNorm params
    w_reduction: (2*C, 4*C)      nn.Linear weight (torch layout; y = x @ W^T)
    returns:     (B, T*(H//2)*(W//2), 2*C)
    """
    H, W = input_resolution
    T = time_dim
    B, L, C = x.shape
    assert L == T * H * W, f"input feature has wrong size: {L} != {T * H * W}"
    assert H % 2 == 0 and W % 2 == 0, f"x size ({H}*{W}) are not even."

    H2, W2 = H // 2, W // 2
    C2 = 2 * C            # lanes per h-parity stream
    C4 = 4 * C
    C2out = 2 * C
    R = B * T * H2        # number of (even,odd) spatial row pairs

    # Metadata-only reshape: one contiguous input; the 2x2 gather happens in
    # the kernel by slicing the size-2 h-parity axis of each block.
    x9 = x.reshape(R, 2, W2, C2)

    # Fold LayerNorm affine into the matmul (all in f32, single cast after):
    #   y = LN(z) @ W^T = ((z - mu) * rstd) @ (diag(gamma) @ W^T) + beta @ W^T
    g = gamma.astype(jnp.float32)
    w_t = w_reduction.astype(jnp.float32).T               # (4C, 2Cout)
    w_s = g[:, None] * w_t                                # gamma folded (f32)
    # Permute rows to the parity-stream order: even-h lanes = [x0|x2],
    # odd-h lanes = [x1|x3] (merged feature order is [x0,x1,x2,x3]).
    w_e = jnp.concatenate([w_s[0:C], w_s[2 * C:3 * C]], axis=0)
    w_o = jnp.concatenate([w_s[C:2 * C], w_s[3 * C:4 * C]], axis=0)
    w_stacked = jnp.stack([w_e, w_o], axis=0).astype(matmul_dtype)  # (2,2C,2Cout)
    b_out = jnp.dot(beta.astype(jnp.float32), w_t).reshape(1, C2out)  # f32

    # Per-generation tile / VMEM sizing.
    vmem_cap = _vmem_capacity_bytes()
    target_block_bytes = (4 << 20) if vmem_cap <= (64 << 20) else (8 << 20)
    x_itemsize = jnp.dtype(x.dtype).itemsize
    tr = _choose_tile(R, W2, C4, x_itemsize, target_block_bytes)
    grid = (pl.cdiv(R, tr),)

    mm_itemsize = jnp.dtype(matmul_dtype).itemsize
    in_block = tr * 2 * W2 * C2 * x_itemsize
    out_block = tr * W2 * C2out * x_itemsize
    w_bytes = 2 * C2 * C2out * mm_itemsize + C2out * 4
    temps = tr * W2 * 2 * C2 * (4 + mm_itemsize) + tr * W2 * C2out * 4
    footprint = 2 * (in_block + out_block + w_bytes) + temps
    vmem_upper = max(32 << 20, min(96 << 20, vmem_cap - (16 << 20)))
    vmem_limit = int(min(max(int(1.5 * footprint), 32 << 20), vmem_upper))

    out = pl.pallas_call(
        _patch_merge_kernel,
        out_shape=jax.ShapeDtypeStruct((R * W2, C2out), x.dtype),
        grid_spec=pltpu.PrefetchScalarGridSpec(
            num_scalar_prefetch=0,
            grid=grid,
            in_specs=[
                pl.BlockSpec((tr, 2, W2, C2), lambda i: (i, 0, 0, 0)),
                pl.BlockSpec((2, C2, C2out), lambda i: (0, 0, 0)),
                pl.BlockSpec((1, C2out), lambda i: (0, 0)),
            ],
            out_specs=pl.BlockSpec((tr * W2, C2out), lambda i: (i, 0)),
        ),
        compiler_params=pltpu.CompilerParams(
            dimension_semantics=("parallel",),
            vmem_limit_bytes=vmem_limit,
        ),
    )(x9, w_stacked, b_out)

    # TODO(synk): for C < 64 the output last dim (2C) is < 128 lanes, so stores
    # are masked partial stores; acceptable here, irrelevant for Swin C >= 64.
    return out.reshape(B, T * H2 * W2, C2out)


def _reference_forward(x, gamma, beta, w_reduction, *, input_resolution, time_dim):
    """Pure-JAX reference matching the PyTorch module (f32 matmul)."""
    H, W = input_resolution
    B, L, C = x.shape
    T = time_dim
    xr = x.reshape(B, T, H, W, C)
    x0 = xr[:, :, 0::2, 0::2, :]
    x1 = xr[:, :, 1::2, 0::2, :]
    x2 = xr[:, :, 0::2, 1::2, :]
    x3 = xr[:, :, 1::2, 1::2, :]
    xm = jnp.concatenate([x0, x1, x2, x3], axis=-1)         # (B, T, H/2, W/2, 4C)
    mu = xm.mean(-1, keepdims=True)
    var = ((xm - mu) ** 2).mean(-1, keepdims=True)
    xn = (xm - mu) / jnp.sqrt(var + EPS) * gamma + beta
    y = jnp.matmul(xn, w_reduction.T, precision=lax.Precision.HIGHEST)
    return y.reshape(B, T * (H // 2) * (W // 2), 2 * C)


if __name__ == "__main__":
    # Small shapes consistent with the module: dim=4, input_resolution=(16,16), time_dim=2
    B, T, H, W, C = 2, 2, 16, 16, 4
    key = jax.random.PRNGKey(0)
    kx, kw, kg, kb = jax.random.split(key, 4)

    x = jax.random.normal(kx, (B, T * H * W, C), dtype=jnp.float32)
    w_reduction = jax.random.normal(kw, (2 * C, 4 * C), dtype=jnp.float32) * (1.0 / (4 * C) ** 0.5)
    gamma = 1.0 + 0.1 * jax.random.normal(kg, (4 * C,), dtype=jnp.float32)
    beta = 0.1 * jax.random.normal(kb, (4 * C,), dtype=jnp.float32)

    expected = _reference_forward(x, gamma, beta, w_reduction,
                                  input_resolution=(H, W), time_dim=T)

    # 1) Full-precision matmul path: tight check of fused gather + LN + folding.
    out_f32 = patch_merge_forward(x, gamma, beta, w_reduction,
                                  input_resolution=(H, W), time_dim=T,
                                  matmul_dtype=jnp.float32)
    out_f32 = jax.block_until_ready(out_f32)
    assert out_f32.shape == (B, T * (H // 2) * (W // 2), 2 * C), out_f32.shape
    err32 = float(jnp.max(jnp.abs(out_f32 - expected)))
    assert err32 < 1e-2, f"f32 path max abs err {err32}"

    # 2) Default bf16-MXU path (the performance configuration).
    out_bf = patch_merge_forward(x, gamma, beta, w_reduction,
                                 input_resolution=(H, W), time_dim=T)
    out_bf = jax.block_until_ready(out_bf)
    assert out_bf.shape == (B, T * (H // 2) * (W // 2), 2 * C), out_bf.shape
    ok = bool(jnp.allclose(out_bf, expected, atol=5e-2, rtol=5e-2))
    assert ok, f"bf16 path max abs err {float(jnp.max(jnp.abs(out_bf - expected)))}"

    print("KERNEL_OK")
</pallas_src>

<mosaic_0001>
module attributes {stable_mosaic.version = 11 : i64} {
  func.func @_patch_merge_kernel(%arg0: i32, %arg1: memref<8x2x8x8xf32, #tpu.memory_space<vmem>>, %arg2: memref<2x8x8xf32, #tpu.memory_space<vmem>>, %arg3: memref<1x8xf32, #tpu.memory_space<vmem>>, %arg4: memref<64x8xf32, #tpu.memory_space<vmem>>) attributes {dimension_semantics = [#tpu.dimension_semantics<parallel>], iteration_bounds = array<i64: 4>, scalar_prefetch = 0 : i64, scratch_operands = 0 : i64, tpu.core_type = #tpu.core_type<tc>, window_params = [{transform_indices = @transform_0, window_bounds = array<i64: 8, 2, 8, 8>}, {pipeline_mode = #tpu.pipeline_mode<synchronous>, transform_indices = @transform_1, window_bounds = array<i64: 2, 8, 8>}, {pipeline_mode = #tpu.pipeline_mode<synchronous>, transform_indices = @transform_2, window_bounds = array<i64: 1, 8>}, {transform_indices = @transform_3, window_bounds = array<i64: 64, 8>}]} {
    %c0 = arith.constant 0 : index
    %c0_0 = arith.constant 0 : index
    %c0_1 = arith.constant 0 : index
    %c0_2 = arith.constant 0 : index
    %0 = vector.load %arg1[%c0, %c0_0, %c0_1, %c0_2] : memref<8x2x8x8xf32, #tpu.memory_space<vmem>>, vector<8x2x8x8xf32>
    %1 = vector.extract_strided_slice %0 {offsets = [0, 0, 0, 0], sizes = [8, 1, 8, 8], strides = [1, 1, 1, 1]} : vector<8x2x8x8xf32> to vector<8x1x8x8xf32>
    %2 = vector.shape_cast %1 : vector<8x1x8x8xf32> to vector<8x8x8xf32>
    %3 = vector.extract_strided_slice %0 {offsets = [0, 1, 0, 0], sizes = [8, 1, 8, 8], strides = [1, 1, 1, 1]} : vector<8x2x8x8xf32> to vector<8x1x8x8xf32>
    %4 = vector.shape_cast %3 : vector<8x1x8x8xf32> to vector<8x8x8xf32>
    %cst = arith.constant dense<0.000000e+00> : vector<8x8xf32>
    %5 = vector.multi_reduction <add>, %2, %cst [2] : vector<8x8x8xf32> to vector<8x8xf32>
    %6 = vector.shape_cast %5 : vector<8x8xf32> to vector<8x8x1xf32>
    %cst_3 = arith.constant dense<0.000000e+00> : vector<8x8xf32>
    %7 = vector.multi_reduction <add>, %4, %cst_3 [2] : vector<8x8x8xf32> to vector<8x8xf32>
    %8 = vector.shape_cast %7 : vector<8x8xf32> to vector<8x8x1xf32>
    %9 = arith.addf %6, %8 : vector<8x8x1xf32>
    %10 = arith.mulf %2, %2 : vector<8x8x8xf32>
    %cst_4 = arith.constant dense<0.000000e+00> : vector<8x8xf32>
    %11 = vector.multi_reduction <add>, %10, %cst_4 [2] : vector<8x8x8xf32> to vector<8x8xf32>
    %12 = vector.shape_cast %11 : vector<8x8xf32> to vector<8x8x1xf32>
    %13 = arith.mulf %4, %4 : vector<8x8x8xf32>
    %cst_5 = arith.constant dense<0.000000e+00> : vector<8x8xf32>
    %14 = vector.multi_reduction <add>, %13, %cst_5 [2] : vector<8x8x8xf32> to vector<8x8xf32>
    %15 = vector.shape_cast %14 : vector<8x8xf32> to vector<8x8x1xf32>
    %16 = arith.addf %12, %15 : vector<8x8x1xf32>
    %cst_6 = arith.constant 6.250000e-02 : f32
    %17 = vector.broadcast %cst_6 : f32 to vector<8x8x1xf32>
    %18 = arith.mulf %9, %17 : vector<8x8x1xf32>
    %cst_7 = arith.constant 6.250000e-02 : f32
    %19 = vector.broadcast %cst_7 : f32 to vector<8x8x1xf32>
    %20 = arith.mulf %16, %19 : vector<8x8x1xf32>
    %21 = arith.mulf %18, %18 : vector<8x8x1xf32>
    %22 = arith.subf %20, %21 : vector<8x8x1xf32>
    %cst_8 = arith.constant 0.000000e+00 : f32
    %23 = vector.broadcast %cst_8 : f32 to vector<8x8x1xf32>
    %24 = arith.maximumf %22, %23 : vector<8x8x1xf32>
    %cst_9 = arith.constant 9.99999974E-6 : f32
    %25 = vector.broadcast %cst_9 : f32 to vector<8x8x1xf32>
    %26 = arith.addf %24, %25 : vector<8x8x1xf32>
    %27 = math.rsqrt %26 : vector<8x8x1xf32>
    %28 = vector.broadcast %18 : vector<8x8x1xf32> to vector<8x8x8xf32>
    %29 = arith.subf %2, %28 : vector<8x8x8xf32>
    %30 = vector.broadcast %27 : vector<8x8x1xf32> to vector<8x8x8xf32>
    %31 = arith.mulf %29, %30 : vector<8x8x8xf32>
    %32 = vector.shape_cast %31 : vector<8x8x8xf32> to vector<64x8xf32>
    %33 = vector.broadcast %18 : vector<8x8x1xf32> to vector<8x8x8xf32>
    %34 = arith.subf %4, %33 : vector<8x8x8xf32>
    %35 = vector.broadcast %27 : vector<8x8x1xf32> to vector<8x8x8xf32>
    %36 = arith.mulf %34, %35 : vector<8x8x8xf32>
    %37 = vector.shape_cast %36 : vector<8x8x8xf32> to vector<64x8xf32>
    %c0_10 = arith.constant 0 : index
    %c0_11 = arith.constant 0 : index
    %c0_12 = arith.constant 0 : index
    %38 = vector.load %arg2[%c0_10, %c0_11, %c0_12] : memref<2x8x8xf32, #tpu.memory_space<vmem>>, vector<1x8x8xf32>
    %39 = vector.shape_cast %38 : vector<1x8x8xf32> to vector<8x8xf32>
    %cst_13 = arith.constant dense<0.000000e+00> : vector<64x8xf32>
    %40 = tpu.matmul %32, %39, %cst_13 {dimension_numbers = #tpu.dot_dimension_numbers<[1], [0], [0], [1], [0, 0, 1, 1], [], []>, precision = #tpu.contract_precision<fp32>} : vector<64x8xf32>, vector<8x8xf32>, vector<64x8xf32> -> vector<64x8xf32>
    %c1 = arith.constant 1 : index
    %c0_14 = arith.constant 0 : index
    %c0_15 = arith.constant 0 : index
    %41 = vector.load %arg2[%c1, %c0_14, %c0_15] : memref<2x8x8xf32, #tpu.memory_space<vmem>>, vector<1x8x8xf32>
    %42 = vector.shape_cast %41 : vector<1x8x8xf32> to vector<8x8xf32>
    %cst_16 = arith.constant dense<0.000000e+00> : vector<64x8xf32>
    %43 = tpu.matmul %37, %42, %cst_16 {dimension_numbers = #tpu.dot_dimension_numbers<[1], [0], [0], [1], [0, 0, 1, 1], [], []>, precision = #tpu.contract_precision<fp32>} : vector<64x8xf32>, vector<8x8xf32>, vector<64x8xf32> -> vector<64x8xf32>
    %44 = arith.addf %40, %43 : vector<64x8xf32>
    %c0_17 = arith.constant 0 : index
    %c0_18 = arith.constant 0 : index
    %45 = vector.load %arg3[%c0_17, %c0_18] : memref<1x8xf32, #tpu.memory_space<vmem>>, vector<1x8xf32>
    %46 = vector.broadcast %45 : vector<1x8xf32> to vector<64x8xf32>
    %47 = arith.addf %44, %46 : vector<64x8xf32>
    %c0_19 = arith.constant 0 : index
    %c0_20 = arith.constant 0 : index
    %48 = vector.load %arg4[%c0_19, %c0_20] : memref<64x8xf32, #tpu.memory_space<vmem>>, vector<64x8xf32>
    tpu.vector_store %arg4[%c0_19, %c0_20], %47 {strides = array<i32>} : memref<64x8xf32, #tpu.memory_space<vmem>>, vector<64x8xf32>,
    return
  }
  func.func @transform_0(%arg0: i32) -> (i32, i32, i32, i32) {
    %c0_i32 = arith.constant 0 : i32
    %c0_i32_0 = arith.constant 0 : i32
    %c0_i32_1 = arith.constant 0 : i32
    %c0_i32_2 = arith.constant 0 : i32
    return %arg0, %c0_i32, %c0_i32_0, %c0_i32_1 : i32, i32, i32, i32
  }
  func.func @transform_1(%arg0: i32) -> (i32, i32, i32) {
    %c0_i32 = arith.constant 0 : i32
    %c0_i32_0 = arith.constant 0 : i32
    %c0_i32_1 = arith.constant 0 : i32
    %c0_i32_2 = arith.constant 0 : i32
    return %c0_i32, %c0_i32_0, %c0_i32_1 : i32, i32, i32
  }
  func.func @transform_2(%arg0: i32) -> (i32, i32) {
    %c0_i32 = arith.constant 0 : i32
    %c0_i32_0 = arith.constant 0 : i32
    %c0_i32_1 = arith.constant 0 : i32
    return %c0_i32, %c0_i32_0 : i32, i32
  }
  func.func @transform_3(%arg0: i32) -> (i32, i32) {
    %c0_i32 = arith.constant 0 : i32
    %c0_i32_0 = arith.constant 0 : i32
    return %arg0, %c0_i32 : i32, i32
  }
}

</mosaic_0001>

<llo_original>
// kernel: patch_merge_forward.1
$region0: #{patch_merge_forward.1}
  #allocation0 [shape = 'u32[]', space=smem, size = 0x4, offset = 0x4, fixed_abs, tag = 'smem constant byte address 0x4 - core index']
  #allocation1 [shape = 'u32[144,128]{1,0:T(1,128)}', space=vmem, size = 0x12000, scoped, tag = 'internal scratch']
  %s0 = inlined_call_operand.vmem [shape: f32[32,2,8,8], index: 0, kind: input, shape index: {}]
  %s1 = inlined_call_operand.vmem [shape: f32[2,8,8], index: 1, kind: input, shape index: {}]
  %s2 = inlined_call_operand.vmem [shape: f32[1,8], index: 2, kind: input, shape index: {}]
  %s3 = inlined_call_operand.vmem [shape: f32[256,8], index: 3, kind: output, shape index: {}]
  %s4 = sld [smem:[#allocation0]]
  $region45: #{patch_merge_forward.1} parent=0
    _
  %s6 = ssub.s32 1, %s4
  %s7 = scalar_select 0, %s6, %s4
  loop: start=0, step=1, limit=6
  $region2: #{patch_merge_forward.1} parent=0 // loop_pre_header
    _
  $region3: #{patch_merge_forward.1} parent=0 // loop_header
    %s9 = sphi 0, %s13
    %p10 = scmp.ge.s32.totalorder %s9, 6
    %s19 = sphi 0, %s21
    %s22 = sphi 0, %s19
    %s23 = sphi 0, %s22
    %s39 = sphi 0, %s23
    %s43 = sphi 0, %s43
    %s45 = sphi 0, %s43
    %s46 = sphi 0, %s45
    %s60 = sphi 0, %s46
    %s64 = sphi 0, %s64
    %s66 = sphi 0, %s64
    %s67 = sphi 0, %s66
    %s81 = sphi 0, %s67
    %s87 = sphi 0, %s89
    %s90 = sphi 0, %s87
    %s91 = sphi 0, %s90
    %s107 = sphi 0, %s91
  $region4: #{patch_merge_forward.1} parent=0 // loop_header_branch
    %12 = sbr.rel (%p10) target = $region8
  $region5: #{patch_merge_forward.1} parent=0 // loop_body
    %s14 = ssub.s32 %s9, 1
    %s15 = ssub.s32 %s9, 2
    %s16 = sadd.s32 %s9, 1
    %s17 = ssub.s32 %s9, %s16
    %p18 = scmp.eq.s32.totalorder %s17, 0
    %s20 = sadd.s32 %s19, 1
    %s21 = scalar_select %p18, %s19, %s20
    %p24 = pneg %p18
    %p25 = scmp.eq.s32.totalorder %s9, 3
    %p26 = por %p24, %p25
    %p27 = scmp.ne.s32.totalorder %s19, %s22
    %p28 = scmp.eq.s32.totalorder %s9, 0
    %p29 = por %p27, %p28
    %p30 = scmp.ne.s32.totalorder %s19, %s22
    %p31 = scmp.eq.s32.totalorder %s14, 3
    %p32 = por %p30, %p31
    %p33 = scmp.ne.s32.totalorder %s22, %s23
    %p34 = scmp.eq.s32.totalorder %s14, 0
    %p35 = por %p33, %p34
    %p36 = scmp.ne.s32.totalorder %s22, %s23
    %p37 = scmp.eq.s32.totalorder %s15, 3
    %p38 = por %p36, %p37
    %p40 = scmp.ne.s32.totalorder %s23, %s39
    %p41 = scmp.eq.s32.totalorder %s15, 0
    %p42 = por %p40, %p41
    %s44 = sadd.s32 %s43, 1
    %p47 = scmp.eq.s32.totalorder %s9, 3
    %p48 = scmp.ne.s32.totalorder %s43, %s45
    %p49 = scmp.eq.s32.totalorder %s9, 0
    %p50 = por %p48, %p49
    %p51 = scmp.ne.s32.totalorder %s43, %s45
    %p52 = scmp.eq.s32.totalorder %s14, 3
    %p53 = por %p51, %p52
    %p54 = scmp.ne.s32.totalorder %s45, %s46
    %p55 = scmp.eq.s32.totalorder %s14, 0
    %p56 = por %p54, %p55
    %p57 = scmp.ne.s32.totalorder %s45, %s46
    %p58 = scmp.eq.s32.totalorder %s15, 3
    %p59 = por %p57, %p58
    %p61 = scmp.ne.s32.totalorder %s46, %s60
    %p62 = scmp.eq.s32.totalorder %s15, 0
    %p63 = por %p61, %p62
    %s65 = sadd.s32 %s64, 1
    %p68 = scmp.eq.s32.totalorder %s9, 3
    %p69 = scmp.ne.s32.totalorder %s64, %s66
    %p70 = scmp.eq.s32.totalorder %s9, 0
    %p71 = por %p69, %p70
    %p72 = scmp.ne.s32.totalorder %s64, %s66
    %p73 = scmp.eq.s32.totalorder %s14, 3
    %p74 = por %p72, %p73
    %p75 = scmp.ne.s32.totalorder %s66, %s67
    %p76 = scmp.eq.s32.totalorder %s14, 0
    %p77 = por %p75, %p76
    %p78 = scmp.ne.s32.totalorder %s66, %s67
    %p79 = scmp.eq.s32.totalorder %s15, 3
    %p80 = por %p78, %p79
    %p82 = scmp.ne.s32.totalorder %s67, %s81
    %p83 = scmp.eq.s32.totalorder %s15, 0
    %p84 = por %p82, %p83
    %s85 = ssub.s32 %s9, %s16
    %p86 = scmp.eq.s32.totalorder %s85, 0
    %s88 = sadd.s32 %s87, 1
    %s89 = scalar_select %p86, %s87, %s88
    %p92 = pneg %p86
    %p93 = scmp.eq.s32.totalorder %s9, 3
    %p94 = por %p92, %p93
    %p95 = scmp.ne.s32.totalorder %s87, %s90
    %p96 = scmp.eq.s32.totalorder %s9, 0
    %p97 = por %p95, %p96
    %p98 = scmp.ne.s32.totalorder %s87, %s90
    %p99 = scmp.eq.s32.totalorder %s14, 3
    %p100 = por %p98, %p99
    %p101 = scmp.ne.s32.totalorder %s90, %s91
    %p102 = scmp.eq.s32.totalorder %s14, 0
    %p103 = por %p101, %p102
    %p104 = scmp.ne.s32.totalorder %s90, %s91
    %p105 = scmp.eq.s32.totalorder %s15, 3
    %p106 = por %p104, %p105
    %p108 = scmp.ne.s32.totalorder %s91, %s107
    %p109 = scmp.eq.s32.totalorder %s15, 0
    %p110 = por %p108, %p109
    %p111 = scmp.le.s32.totalorder 1, %s9
    %p112 = scmp.lt.s32.totalorder %s9, 5
    %p113 = pnand %p111, %p112
    %p114 = pneg %p113
    // Predicated region
    $region9: #{patch_merge_forward.1} parent=5 // pred_check
      _
    $region10: #{patch_merge_forward.1} parent=5 // pred_check_branch
      %116 = sbr.rel (%p113) target = $region12
    $region11: #{patch_merge_forward.1} parent=5 // pred_region
      %s117 = ssub.s32 %s9, 1
      // Predicated region
      $region13: #{patch_merge_forward.1} parent=11 // pred_check
        %p118 = pneg %p56
      $region14: #{patch_merge_forward.1} parent=11 // pred_check_branch
        %120 = sbr.rel (%p118) target = $region16
      $region15: #{patch_merge_forward.1} parent=11 // pred_region
        _
      $region16: #{patch_merge_forward.1} parent=11 // pred_fallthru
        _
      // Predicated region
      $region17: #{patch_merge_forward.1} parent=11 // pred_check
        %p121 = pneg %p77
      $region18: #{patch_merge_forward.1} parent=11 // pred_check_branch
        %123 = sbr.rel (%p121) target = $region20
      $region19: #{patch_merge_forward.1} parent=11 // pred_region
        _
      $region20: #{patch_merge_forward.1} parent=11 // pred_fallthru
        _
    $region12: #{patch_merge_forward.1} parent=5 // pred_fallthru
      _
    %p124 = scmp.lt.s32.totalorder %s9, 4
    // Predicated region
    $region21: #{patch_merge_forward.1} parent=5 // pred_check
      %p125 = pneg %p124
    $region22: #{patch_merge_forward.1} parent=5 // pred_check_branch
      %127 = sbr.rel (%p125) target = $region24
    $region23: #{patch_merge_forward.1} parent=5 // pred_region
      // Predicated region
      $region25: #{patch_merge_forward.1} parent=23 // pred_check
        %p128 = pneg %p29
      $region26: #{patch_merge_forward.1} parent=23 // pred_check_branch
        %130 = sbr.rel (%p128) target = $region28
      $region27: #{patch_merge_forward.1} parent=23 // pred_region
        %s131 = smul.u32 8, %s9
        %p132 = scmp.lt.s32.totalorder %s131, 31
        %s133 = scalar_select %p132, %s131, 31
        %s134 = smul.addr %s133, 2
        %s135 = smul.addr %s134, 8
        %s136 = scalar_lea.vmem %s0, %s135
        %s137 = smul.u32 8, %s9
      $region28: #{patch_merge_forward.1} parent=23 // pred_fallthru
        _
    $region24: #{patch_merge_forward.1} parent=5 // pred_fallthru
      _
    %p138 = scmp.le.s32.totalorder 1, %s9
    %p139 = scmp.lt.s32.totalorder %s9, 5
    %p140 = pnand %p138, %p139
    %p141 = pneg %p140
    // Predicated region
    $region29: #{patch_merge_forward.1} parent=5 // pred_check
      _
    $region30: #{patch_merge_forward.1} parent=5 // pred_check_branch
      %143 = sbr.rel (%p140) target = $region32
    $region31: #{patch_merge_forward.1} parent=5 // pred_region
      %s144 = ssub.s32 %s9, 1
      %s145 = smul.u32 8, %s14
      %p146 = scmp.lt.s32.totalorder %s145, 31
      %s147 = scalar_select %p146, %s145, 31
      %s148 = smul.addr %s147, 2
      %s149 = smul.addr %s148, 8
      %s150 = scalar_lea.vmem %s0, %s149
      %p151 = pneg %p35
      %p152 = pneg %p32
      %p153 = pneg %p56
      %p154 = pneg %p53
      %p155 = pneg %p77
      %p156 = pneg %p74
      %p157 = pneg %p103
      %p158 = pneg %p100
      %s159 = smul.u32 8, %s14
      %p160 = scmp.lt.s32.totalorder %s159, 31
      %s161 = scalar_select %p160, %s159, 31
      %s162 = smul.addr %s161, 8
      %s163 = scalar_lea.vmem %s3, %s162
      %s164 = smul.u32 8, %s14
      %p165 = scmp.lt.s32.totalorder %s164, 31
      %s166 = scalar_select %p165, %s164, 31
      %s167 = smul.addr %s166, 2
      %s168 = smul.addr %s167, 8
      %s169 = scalar_lea.vmem %s0, %s168
      %s170 = smul.u32 8, %s14
      %s171 = smul.u32 8, %s14
      %p172 = scmp.lt.s32.totalorder %s171, 31
      %s173 = scalar_select %p172, %s171, 31
      %s174 = smul.addr %s173, 8
      %s175 = scalar_lea.vmem %s3, %s174
      %s176 = smul.u32 8, %s14
      %v177 = vld [vmem:[%s169] sm:$0xff]
      %v178 = vld [vmem:[%s169 + $0x8] sm:$0xff]
      %v179 = vld [vmem:[%s169 + $0x10] sm:$0xff]
      %v180 = vld [vmem:[%s169 + $0x18] sm:$0xff]
      %v181 = vld [vmem:[%s169 + $0x20] sm:$0xff]
      %v182 = vld [vmem:[%s169 + $0x28] sm:$0xff]
      %v183 = vld [vmem:[%s169 + $0x30] sm:$0xff]
      %v184 = vld [vmem:[%s169 + $0x38] sm:$0xff]
      %v185 = vld [vmem:[%s169 + $0x40] sm:$0xff]
      %v186 = vld [vmem:[%s169 + $0x48] sm:$0xff]
      %v187 = vld [vmem:[%s169 + $0x50] sm:$0xff]
      %v188 = vld [vmem:[%s169 + $0x58] sm:$0xff]
      %v189 = vld [vmem:[%s169 + $0x60] sm:$0xff]
      %v190 = vld [vmem:[%s169 + $0x68] sm:$0xff]
      %v191 = vld [vmem:[%s169 + $0x70] sm:$0xff]
      %v192 = vld [vmem:[%s169 + $0x78] sm:$0xff]
      %vm193 = vcmask 64512
      %v194 = vsel %vm193, %v177, 0.0
      %195 = vadd.xlane.f32.xlu0 %v194
      %v196 = vpop.xlane.xlu0 %195
      %v197 = vsel %vm193, %v179, 0.0
      %198 = vadd.xlane.f32.xlu0 %v197
      %v199 = vpop.xlane.xlu0 %198
      %v200 = vsel %vm193, %v181, 0.0
      %201 = vadd.xlane.f32.xlu0 %v200
      %v202 = vpop.xlane.xlu0 %201
      %v203 = vsel %vm193, %v183, 0.0
      %204 = vadd.xlane.f32.xlu0 %v203
      %v205 = vpop.xlane.xlu0 %204
      %v206 = vsel %vm193, %v185, 0.0
      %207 = vadd.xlane.f32.xlu0 %v206
      %v208 = vpop.xlane.xlu0 %207
      %v209 = vsel %vm193, %v187, 0.0
      %210 = vadd.xlane.f32.xlu0 %v209
      %v211 = vpop.xlane.xlu0 %210
      %v212 = vsel %vm193, %v189, 0.0
      %213 = vadd.xlane.f32.xlu0 %v212
      %v214 = vpop.xlane.xlu0 %213
      %v215 = vsel %vm193, %v191, 0.0
      %216 = vadd.xlane.f32.xlu0 %v215
      %v217 = vpop.xlane.xlu0 %216
      %v218 = vsel %vm193, %v178, 0.0
      %219 = vadd.xlane.f32.xlu0 %v218
      %v220 = vpop.xlane.xlu0 %219
      %v221 = vsel %vm193, %v180, 0.0
      %222 = vadd.xlane.f32.xlu0 %v221
      %v223 = vpop.xlane.xlu0 %222
      %v224 = vsel %vm193, %v182, 0.0
      %225 = vadd.xlane.f32.xlu0 %v224
      %v226 = vpop.xlane.xlu0 %225
      %v227 = vsel %vm193, %v184, 0.0
      %228 = vadd.xlane.f32.xlu0 %v227
      %v229 = vpop.xlane.xlu0 %228
      %v230 = vsel %vm193, %v186, 0.0
      %231 = vadd.xlane.f32.xlu0 %v230
      %v232 = vpop.xlane.xlu0 %231
      %v233 = vsel %vm193, %v188, 0.0
      %234 = vadd.xlane.f32.xlu0 %v233
      %v235 = vpop.xlane.xlu0 %234
      %v236 = vsel %vm193, %v190, 0.0
      %237 = vadd.xlane.f32.xlu0 %v236
      %v238 = vpop.xlane.xlu0 %237
      %v239 = vsel %vm193, %v192, 0.0
      %240 = vadd.xlane.f32.xlu0 %v239
      %v241 = vpop.xlane.xlu0 %240
      %v242 = vadd.f32 %v196, %v220
      %v243 = vadd.f32 %v199, %v223
      %v244 = vadd.f32 %v202, %v226
      %v245 = vadd.f32 %v205, %v229
      %v246 = vadd.f32 %v208, %v232
      %v247 = vadd.f32 %v211, %v235
      %v248 = vadd.f32 %v214, %v238
      %v249 = vadd.f32 %v217, %v241
      %v250 = vmul.f32 %v177, %v177
      %v251 = vmul.f32 %v179, %v179
      %v252 = vmul.f32 %v181, %v181
      %v253 = vmul.f32 %v183, %v183
      %v254 = vmul.f32 %v185, %v185
      %v255 = vmul.f32 %v187, %v187
      %v256 = vmul.f32 %v189, %v189
      %v257 = vmul.f32 %v191, %v191
      %v258 = vsel %vm193, %v250, 0.0
      %259 = vadd.xlane.f32.xlu0 %v258
      %v260 = vpop.xlane.xlu0 %259
      %v261 = vsel %vm193, %v251, 0.0
      %262 = vadd.xlane.f32.xlu0 %v261
      %v263 = vpop.xlane.xlu0 %262
      %v264 = vsel %vm193, %v252, 0.0
      %265 = vadd.xlane.f32.xlu0 %v264
      %v266 = vpop.xlane.xlu0 %265
      %v267 = vsel %vm193, %v253, 0.0
      %268 = vadd.xlane.f32.xlu0 %v267
      %v269 = vpop.xlane.xlu0 %268
      %v270 = vsel %vm193, %v254, 0.0
      %271 = vadd.xlane.f32.xlu0 %v270
      %v272 = vpop.xlane.xlu0 %271
      %v273 = vsel %vm193, %v255, 0.0
      %274 = vadd.xlane.f32.xlu0 %v273
      %v275 = vpop.xlane.xlu0 %274
      %v276 = vsel %vm193, %v256, 0.0
      %277 = vadd.xlane.f32.xlu0 %v276
      %v278 = vpop.xlane.xlu0 %277
      %v279 = vsel %vm193, %v257, 0.0
      %280 = vadd.xlane.f32.xlu0 %v279
      %v281 = vpop.xlane.xlu0 %280
      %v282 = vmul.f32 %v178, %v178
      %v283 = vmul.f32 %v180, %v180
      %v284 = vmul.f32 %v182, %v182
      %v285 = vmul.f32 %v184, %v184
      %v286 = vmul.f32 %v186, %v186
      %v287 = vmul.f32 %v188, %v188
      %v288 = vmul.f32 %v190, %v190
      %v289 = vmul.f32 %v192, %v192
      %v290 = vsel %vm193, %v282, 0.0
      %291 = vadd.xlane.f32.xlu0 %v290
      %v292 = vpop.xlane.xlu0 %291
      %v293 = vsel %vm193, %v283, 0.0
      %294 = vadd.xlane.f32.xlu0 %v293
      %v295 = vpop.xlane.xlu0 %294
      %v296 = vsel %vm193, %v284, 0.0
      %297 = vadd.xlane.f32.xlu0 %v296
      %v298 = vpop.xlane.xlu0 %297
      %v299 = vsel %vm193, %v285, 0.0
      %300 = vadd.xlane.f32.xlu0 %v299
      %v301 = vpop.xlane.xlu0 %300
      %v302 = vsel %vm193, %v286, 0.0
      %303 = vadd.xlane.f32.xlu0 %v302
      %v304 = vpop.xlane.xlu0 %303
      %v305 = vsel %vm193, %v287, 0.0
      %306 = vadd.xlane.f32.xlu0 %v305
      %v307 = vpop.xlane.xlu0 %306
      %v308 = vsel %vm193, %v288, 0.0
      %309 = vadd.xlane.f32.xlu0 %v308
      %v310 = vpop.xlane.xlu0 %309
      %v311 = vsel %vm193, %v289, 0.0
      %312 = vadd.xlane.f32.xlu0 %v311
      %v313 = vpop.xlane.xlu0 %312
      %v314 = vadd.f32 %v260, %v292
      %v315 = vadd.f32 %v263, %v295
      %v316 = vadd.f32 %v266, %v298
      %v317 = vadd.f32 %v269, %v301
      %v318 = vadd.f32 %v272, %v304
      %v319 = vadd.f32 %v275, %v307
      %v320 = vadd.f32 %v278, %v310
      %v321 = vadd.f32 %v281, %v313
      %v322 = vmul.f32 %v242, 0.0625
      %v323 = vmul.f32 %v243, 0.0625
      %v324 = vmul.f32 %v244, 0.0625
      %v325 = vmul.f32 %v245, 0.0625
      %v326 = vmul.f32 %v246, 0.0625
      %v327 = vmul.f32 %v247, 0.0625
      %v328 = vmul.f32 %v248, 0.0625
      %v329 = vmul.f32 %v249, 0.0625
      %v330 = vmul.f32 %v314, 0.0625
      %v331 = vmul.f32 %v315, 0.0625
      %v332 = vmul.f32 %v316, 0.0625
      %v333 = vmul.f32 %v317, 0.0625
      %v334 = vmul.f32 %v318, 0.0625
      %v335 = vmul.f32 %v319, 0.0625
      %v336 = vmul.f32 %v320, 0.0625
      %v337 = vmul.f32 %v321, 0.0625
      %v338 = vmul.f32 %v322, %v322
      %v339 = vmul.f32 %v323, %v323
      %v340 = vmul.f32 %v324, %v324
      %v341 = vmul.f32 %v325, %v325
      %v342 = vmul.f32 %v326, %v326
      %v343 = vmul.f32 %v327, %v327
      %v344 = vmul.f32 %v328, %v328
      %v345 = vmul.f32 %v329, %v329
      %v346 = vsub.f32 %v330, %v338
      %v347 = vsub.f32 %v331, %v339
      %v348 = vsub.f32 %v332, %v340
      %v349 = vsub.f32 %v333, %v341
      %v350 = vsub.f32 %v334, %v342
      %v351 = vsub.f32 %v335, %v343
      %v352 = vsub.f32 %v336, %v344
      %v353 = vsub.f32 %v337, %v345
      %v354 = vmax.f32 %v346, 0.0
      %v355 = vmax.f32 %v347, 0.0
      %v356 = vmax.f32 %v348, 0.0
      %v357 = vmax.f32 %v349, 0.0
      %v358 = vmax.f32 %v350, 0.0
      %v359 = vmax.f32 %v351, 0.0
      %v360 = vmax.f32 %v352, 0.0
      %v361 = vmax.f32 %v353, 0.0
      %v362 = vadd.f32 %v354, 1e-05
      %v363 = vadd.f32 %v355, 1e-05
      %v364 = vadd.f32 %v356, 1e-05
      %v365 = vadd.f32 %v357, 1e-05
      %v366 = vadd.f32 %v358, 1e-05
      %v367 = vadd.f32 %v359, 1e-05
      %v368 = vadd.f32 %v360, 1e-05
      %v369 = vadd.f32 %v361, 1e-05
      %v370 = vrsqrt.pop %v362
      %v371 = vrsqrt.pop %v363
      %v372 = vrsqrt.pop %v364
      %v373 = vrsqrt.pop %v365
      %v374 = vrsqrt.pop %v366
      %v375 = vrsqrt.pop %v367
      %v376 = vrsqrt.pop %v368
      %v377 = vrsqrt.pop %v369
      %v378 = vsub.f32 %v177, %v322
      %v379 = vsub.f32 %v179, %v323
      %v380 = vsub.f32 %v181, %v324
      %v381 = vsub.f32 %v183, %v325
      %v382 = vsub.f32 %v185, %v326
      %v383 = vsub.f32 %v187, %v327
      %v384 = vsub.f32 %v189, %v328
      %v385 = vsub.f32 %v191, %v329
      %v386 = vmul.f32 %v378, %v370
      %v387 = vmul.f32 %v379, %v371
      %v388 = vmul.f32 %v380, %v372
      %v389 = vmul.f32 %v381, %v373
      %v390 = vmul.f32 %v382, %v374
      %v391 = vmul.f32 %v383, %v375
      %v392 = vmul.f32 %v384, %v376
      %v393 = vmul.f32 %v385, %v377
      %v394 = vsub.f32 %v178, %v322
      %v395 = vsub.f32 %v180, %v323
      %v396 = vsub.f32 %v182, %v324
      %v397 = vsub.f32 %v184, %v325
      %v398 = vsub.f32 %v186, %v326
      %v399 = vsub.f32 %v188, %v327
      %v400 = vsub.f32 %v190, %v328
      %v401 = vsub.f32 %v192, %v329
      %v402 = vmul.f32 %v394, %v370
      %v403 = vmul.f32 %v395, %v371
      %v404 = vmul.f32 %v396, %v372
      %v405 = vmul.f32 %v397, %v373
      %v406 = vmul.f32 %v398, %v374
      %v407 = vmul.f32 %v399, %v375
      %v408 = vmul.f32 %v400, %v376
      %v409 = vmul.f32 %v401, %v377
      %v410 = vld [vmem:[%s1] sm:$0xff]
      %s411 = scalar_lea.vmem %s1, 8
      %v412 = vld [vmem:[%s411] sm:$0xff]
      %v414 = vsel %vm193, %v402, 0
      %v417 = vsel %vm193, %v403, 0
      %v420 = vsel %vm193, %v404, 0
      %v423 = vsel %vm193, %v405, 0
      %v426 = vsel %vm193, %v406, 0
      %v429 = vsel %vm193, %v407, 0
      %v432 = vsel %vm193, %v408, 0
      %v435 = vsel %vm193, %v409, 0
      %437 = vmatprep.subr.mxu0 0.0
      %v438 = vand.u32 %v412, 4294901760
      %439 = vmatpush1.msra.mxu0 %v438
      %440 = vmatprep.subr.mxu0 0.0
      %441 = vmatpush1.msra.mxu0 0.0
      %442 = vmatprep.subr.mxu0 0.0
      %443 = vmatpush1.msra.mxu0 0.0
      %444 = vmatprep.subr.mxu0 0.0
      %445 = vmatpush1.msra.mxu0 0.0
      %446 = vmatprep.subr.mxu0 0.0
      %447 = vmatpush1.msra.mxu0 0.0
      %448 = vmatprep.subr.mxu0 0.0
      %449 = vmatpush1.msra.mxu0 0.0
      %450 = vmatprep.subr.mxu0 0.0
      %451 = vmatpush1.msra.mxu0 0.0
      %452 = vmatprep.subr.mxu0 0.0
      %453 = vmatpush1.msra.mxu0 0.0
      %454 = vmatprep.subr.mxu0 0.0
      %455 = vmatpush1.msra.mxu0 0.0
      %456 = vmatprep.subr.mxu0 0.0
      %457 = vmatpush1.msra.mxu0 0.0
      %458 = vmatprep.subr.mxu0 0.0
      %459 = vmatpush1.msra.mxu0 0.0
      %460 = vmatprep.subr.mxu0 0.0
      %461 = vmatpush1.msra.mxu0 0.0
      %462 = vmatprep.subr.mxu0 0.0
      %463 = vmatpush1.msra.mxu0 0.0
      %464 = vmatprep.subr.mxu0 0.0
      %465 = vmatpush1.msra.mxu0 0.0
      %466 = vmatprep.subr.mxu0 0.0
      %467 = vmatpush1.msra.mxu0 0.0
      %468 = vmatprep.subr.mxu0 0.0
      %469 = vmatpush1.msra.mxu0 0.0
      %470 = vmatprep.subr.mxu0 0.0
      %471 = vmatpush1.msra.mxu0 0.0
      %472 = vmatprep.subr.mxu0 0.0
      %473 = vmatpush1.msra.mxu0 0.0
      %474 = vmatprep.subr.mxu0 0.0
      %475 = vmatpush1.msra.mxu0 0.0
      %476 = vmatprep.subr.mxu0 0.0
      %477 = vmatpush1.msra.mxu0 0.0
      %478 = vmatprep.subr.mxu0 0.0
      %479 = vmatpush1.msra.mxu0 0.0
      %480 = vmatprep.subr.mxu0 0.0
      %481 = vmatpush1.msra.mxu0 0.0
      %482 = vmatprep.subr.mxu0 0.0
      %483 = vmatpush1.msra.mxu0 0.0
      %484 = vmatprep.subr.mxu0 0.0
      %485 = vmatpush1.msra.mxu0 0.0
      %486 = vmatprep.subr.mxu0 0.0
      %487 = vmatpush1.msra.mxu0 0.0
      %488 = vmatprep.subr.mxu0 0.0
      %489 = vmatpush1.msra.mxu0 0.0
      %490 = vmatprep.subr.mxu0 0.0
      %491 = vmatpush1.msra.mxu0 0.0
      %492 = vmatprep.subr.mxu0 0.0
      %493 = vmatpush1.msra.mxu0 0.0
      %494 = vmatprep.subr.mxu0 0.0
      %495 = vmatpush1.msra.mxu0 0.0
      %496 = vmatprep.subr.mxu0 0.0
      %497 = vmatpush1.msra.mxu0 0.0
      %498 = vmatprep.subr.mxu0 0.0
      %499 = vmatpush1.msra.mxu0 0.0
      %500 = vmatprep.subr.mxu0 0.0
      %501 = vmatpush1.msra.mxu0 0.0
      %502 = vmatprep.mubr.f32.mxu0 0.0
      %v503 = vand.u32 %v414, 4294901760
      %v504 = vsub.f32 %v414, %v503
      %v505 = vand.u32 %v504, 4294901760
      %v506 = vsub.f32 %v504, %v505
      %v507 = vand.u32 %v506, 4294901760
      %508 = vmatmul.mubr.f32.gmra.mrb[0].mxu0 %v507
      %v509 = vpop.f32.mrb[0].mxu0
      %v510 = vadd.f32 0.0, %v509
      %v511 = vpop.f32.mrb[0].mxu0
      %512 = vmatprep.mubr.f32.mxu0 0.0
      %v513 = vand.u32 %v417, 4294901760
      %v514 = vsub.f32 %v417, %v513
      %v515 = vand.u32 %v514, 4294901760
      %v516 = vsub.f32 %v514, %v515
      %v517 = vand.u32 %v516, 4294901760
      %518 = vmatmul.mubr.f32.gmra.mrb[0].mxu0 %v517
      %v519 = vpop.f32.mrb[0].mxu0
      %v520 = vadd.f32 0.0, %v519
      %v521 = vpop.f32.mrb[0].mxu0
      %522 = vmatprep.mubr.f32.mxu0 0.0
      %v523 = vand.u32 %v420, 4294901760
      %v524 = vsub.f32 %v420, %v523
      %v525 = vand.u32 %v524, 4294901760
      %v526 = vsub.f32 %v524, %v525
      %v527 = vand.u32 %v526, 4294901760
      %528 = vmatmul.mubr.f32.gmra.mrb[0].mxu0 %v527
      %v529 = vpop.f32.mrb[0].mxu0
      %v530 = vadd.f32 0.0, %v529
      %v531 = vpop.f32.mrb[0].mxu0
      %532 = vmatprep.mubr.f32.mxu0 0.0
      %v533 = vand.u32 %v423, 4294901760
      %v534 = vsub.f32 %v423, %v533
      %v535 = vand.u32 %v534, 4294901760
      %v536 = vsub.f32 %v534, %v535
      %v537 = vand.u32 %v536, 4294901760
      %538 = vmatmul.mubr.f32.gmra.mrb[0].mxu0 %v537
      %v539 = vpop.f32.mrb[0].mxu0
      %v540 = vadd.f32 0.0, %v539
      %v541 = vpop.f32.mrb[0].mxu0
      %542 = vmatprep.mubr.f32.mxu0 0.0
      %v543 = vand.u32 %v426, 4294901760
      %v544 = vsub.f32 %v426, %v543
      %v545 = vand.u32 %v544, 4294901760
      %v546 = vsub.f32 %v544, %v545
      %v547 = vand.u32 %v546, 4294901760
      %548 = vmatmul.mubr.f32.gmra.mrb[0].mxu0 %v547
      %v549 = vpop.f32.mrb[0].mxu0
      %v550 = vadd.f32 0.0, %v549
      %v551 = vpop.f32.mrb[0].mxu0
      %552 = vmatprep.mubr.f32.mxu0 0.0
      %v553 = vand.u32 %v429, 4294901760
      %v554 = vsub.f32 %v429, %v553
      %v555 = vand.u32 %v554, 4294901760
      %v556 = vsub.f32 %v554, %v555
      %v557 = vand.u32 %v556, 4294901760
      %558 = vmatmul.mubr.f32.gmra.mrb[0].mxu0 %v557
      %v559 = vpop.f32.mrb[0].mxu0
      %v560 = vadd.f32 0.0, %v559
      %v561 = vpop.f32.mrb[0].mxu0
      %562 = vmatprep.mubr.f32.mxu0 0.0
      %v563 = vand.u32 %v432, 4294901760
      %v564 = vsub.f32 %v432, %v563
      %v565 = vand.u32 %v564, 4294901760
      %v566 = vsub.f32 %v564, %v565
      %v567 = vand.u32 %v566, 4294901760
      %568 = vmatmul.mubr.f32.gmra.mrb[0].mxu0 %v567
      %v569 = vpop.f32.mrb[0].mxu0
      %v570 = vadd.f32 0.0, %v569
      %v571 = vpop.f32.mrb[0].mxu0
      %572 = vmatprep.mubr.f32.mxu0 0.0
      %v573 = vand.u32 %v435, 4294901760
      %v574 = vsub.f32 %v435, %v573
      %v575 = vand.u32 %v574, 4294901760
      %v576 = vsub.f32 %v574, %v575
      %v577 = vand.u32 %v576, 4294901760
      %578 = vmatmul.mubr.f32.gmra.mrb[0].mxu0 %v577
      %v579 = vpop.f32.mrb[0].mxu0
      %v580 = vadd.f32 0.0, %v579
      %v581 = vpop.f32.mrb[0].mxu0
      %582 = vdwg.mxu0
      %583 = vmatprep.subr.mxu0 0.0
      %v584 = vand.u32 %v412, 4294901760
      %v585 = vsub.f32 %v412, %v584
      %v586 = vand.u32 %v585, 4294901760
      %v587 = vsub.f32 %v585, %v586
      %v588 = vand.u32 %v587, 4294901760
      %589 = vmatpush1.msra.mxu0 %v588
      %590 = vmatprep.subr.mxu0 0.0
      %591 = vmatpush1.msra.mxu0 0.0
      %592 = vmatprep.subr.mxu0 0.0
      %593 = vmatpush1.msra.mxu0 0.0
      %594 = vmatprep.subr.mxu0 0.0
      %595 = vmatpush1.msra.mxu0 0.0
      %596 = vmatprep.subr.mxu0 0.0
      %597 = vmatpush1.msra.mxu0 0.0
      %598 = vmatprep.subr.mxu0 0.0
      %599 = vmatpush1.msra.mxu0 0.0
      %600 = vmatprep.subr.mxu0 0.0
      %601 = vmatpush1.msra.mxu0 0.0
      %602 = vmatprep.subr.mxu0 0.0
      %603 = vmatpush1.msra.mxu0 0.0
      %604 = vmatprep.subr.mxu0 0.0
      %605 = vmatpush1.msra.mxu0 0.0
      %606 = vmatprep.subr.mxu0 0.0
      %607 = vmatpush1.msra.mxu0 0.0
      %608 = vmatprep.subr.mxu0 0.0
      %609 = vmatpush1.msra.mxu0 0.0
      %610 = vmatprep.subr.mxu0 0.0
      %611 = vmatpush1.msra.mxu0 0.0
      %612 = vmatprep.subr.mxu0 0.0
      %613 = vmatpush1.msra.mxu0 0.0
      %614 = vmatprep.subr.mxu0 0.0
      %615 = vmatpush1.msra.mxu0 0.0
      %616 = vmatprep.subr.mxu0 0.0
      %617 = vmatpush1.msra.mxu0 0.0
      %618 = vmatprep.subr.mxu0 0.0
      %619 = vmatpush1.msra.mxu0 0.0
      %620 = vmatprep.subr.mxu0 0.0
      %621 = vmatpush1.msra.mxu0 0.0
      %622 = vmatprep.subr.mxu0 0.0
      %623 = vmatpush1.msra.mxu0 0.0
      %624 = vmatprep.subr.mxu0 0.0
      %625 = vmatpush1.msra.mxu0 0.0
      %626 = vmatprep.subr.mxu0 0.0
      %627 = vmatpush1.msra.mxu0 0.0
      %628 = vmatprep.subr.mxu0 0.0
      %629 = vmatpush1.msra.mxu0 0.0
      %630 = vmatprep.subr.mxu0 0.0
      %631 = vmatpush1.msra.mxu0 0.0
      %632 = vmatprep.subr.mxu0 0.0
      %633 = vmatpush1.msra.mxu0 0.0
      %634 = vmatprep.subr.mxu0 0.0
      %635 = vmatpush1.msra.mxu0 0.0
      %636 = vmatprep.subr.mxu0 0.0
      %637 = vmatpush1.msra.mxu0 0.0
      %638 = vmatprep.subr.mxu0 0.0
      %639 = vmatpush1.msra.mxu0 0.0
      %640 = vmatprep.subr.mxu0 0.0
      %641 = vmatpush1.msra.mxu0 0.0
      %642 = vmatprep.subr.mxu0 0.0
      %643 = vmatpush1.msra.mxu0 0.0
      %644 = vmatprep.subr.mxu0 0.0
      %645 = vmatpush1.msra.mxu0 0.0
      %646 = vmatprep.subr.mxu0 0.0
      %647 = vmatpush1.msra.mxu0 0.0
      %648 = vmatprep.subr.mxu0 0.0
      %649 = vmatpush1.msra.mxu0 0.0
      %650 = vmatprep.subr.mxu0 0.0
      %651 = vmatpush1.msra.mxu0 0.0
      %652 = vmatprep.mubr.f32.mxu0 0.0
      %v653 = vand.u32 %v414, 4294901760
      %654 = vmatmul.mubr.f32.gmra.mrb[0].mxu0 %v653
      %v655 = vpop.f32.mrb[0].mxu0
      %v656 = vadd.f32 %v510, %v655
      %v657 = vpop.f32.mrb[0].mxu0
      %658 = vmatprep.mubr.f32.mxu0 0.0
      %v659 = vand.u32 %v417, 4294901760
      %660 = vmatmul.mubr.f32.gmra.mrb[0].mxu0 %v659
      %v661 = vpop.f32.mrb[0].mxu0
      %v662 = vadd.f32 %v520, %v661
      %v663 = vpop.f32.mrb[0].mxu0
      %664 = vmatprep.mubr.f32.mxu0 0.0
      %v665 = vand.u32 %v420, 4294901760
      %666 = vmatmul.mubr.f32.gmra.mrb[0].mxu0 %v665
      %v667 = vpop.f32.mrb[0].mxu0
      %v668 = vadd.f32 %v530, %v667
      %v669 = vpop.f32.mrb[0].mxu0
      %670 = vmatprep.mubr.f32.mxu0 0.0
      %v671 = vand.u32 %v423, 4294901760
      %672 = vmatmul.mubr.f32.gmra.mrb[0].mxu0 %v671
      %v673 = vpop.f32.mrb[0].mxu0
      %v674 = vadd.f32 %v540, %v673
      %v675 = vpop.f32.mrb[0].mxu0
      %676 = vmatprep.mubr.f32.mxu0 0.0
      %v677 = vand.u32 %v426, 4294901760
      %678 = vmatmul.mubr.f32.gmra.mrb[0].mxu0 %v677
      %v679 = vpop.f32.mrb[0].mxu0
      %v680 = vadd.f32 %v550, %v679
      %v681 = vpop.f32.mrb[0].mxu0
      %682 = vmatprep.mubr.f32.mxu0 0.0
      %v683 = vand.u32 %v429, 4294901760
      %684 = vmatmul.mubr.f32.gmra.mrb[0].mxu0 %v683
      %v685 = vpop.f32.mrb[0].mxu0
      %v686 = vadd.f32 %v560, %v685
      %v687 = vpop.f32.mrb[0].mxu0
      %688 = vmatprep.mubr.f32.mxu0 0.0
      %v689 = vand.u32 %v432, 4294901760
      %690 = vmatmul.mubr.f32.gmra.mrb[0].mxu0 %v689
      %v691 = vpop.f32.mrb[0].mxu0
      %v692 = vadd.f32 %v570, %v691
      %v693 = vpop.f32.mrb[0].mxu0
      %694 = vmatprep.mubr.f32.mxu0 0.0
      %v695 = vand.u32 %v435, 4294901760
      %696 = vmatmul.mubr.f32.gmra.mrb[0].mxu0 %v695
      %v697 = vpop.f32.mrb[0].mxu0
      %v698 = vadd.f32 %v580, %v697
      %v699 = vpop.f32.mrb[0].mxu0
      %700 = vdwg.mxu0
      %701 = vmatprep.subr.mxu0 0.0
      %v702 = vand.u32 %v412, 4294901760
      %v703 = vsub.f32 %v412, %v702
      %704 = vmatpush1.msra.mxu0 %v703
      %705 = vmatprep.subr.mxu0 0.0
      %706 = vmatpush1.msra.mxu0 0.0
      %707 = vmatprep.subr.mxu0 0.0
      %708 = vmatpush1.msra.mxu0 0.0
      %709 = vmatprep.subr.mxu0 0.0
      %710 = vmatpush1.msra.mxu0 0.0
      %711 = vmatprep.subr.mxu0 0.0
      %712 = vmatpush1.msra.mxu0 0.0
      %713 = vmatprep.subr.mxu0 0.0
      %714 = vmatpush1.msra.mxu0 0.0
      %715 = vmatprep.subr.mxu0 0.0
      %716 = vmatpush1.msra.mxu0 0.0
      %717 = vmatprep.subr.mxu0 0.0
      %718 = vmatpush1.msra.mxu0 0.0
      %719 = vmatprep.subr.mxu0 0.0
      %720 = vmatpush1.msra.mxu0 0.0
      %721 = vmatprep.subr.mxu0 0.0
      %722 = vmatpush1.msra.mxu0 0.0
      %723 = vmatprep.subr.mxu0 0.0
      %724 = vmatpush1.msra.mxu0 0.0
      %725 = vmatprep.subr.mxu0 0.0
      %726 = vmatpush1.msra.mxu0 0.0
      %727 = vmatprep.subr.mxu0 0.0
      %728 = vmatpush1.msra.mxu0 0.0
      %729 = vmatprep.subr.mxu0 0.0
      %730 = vmatpush1.msra.mxu0 0.0
      %731 = vmatprep.subr.mxu0 0.0
      %732 = vmatpush1.msra.mxu0 0.0
      %733 = vmatprep.subr.mxu0 0.0
      %734 = vmatpush1.msra.mxu0 0.0
      %735 = vmatprep.subr.mxu0 0.0
      %736 = vmatpush1.msra.mxu0 0.0
      %737 = vmatprep.subr.mxu0 0.0
      %738 = vmatpush1.msra.mxu0 0.0
      %739 = vmatprep.subr.mxu0 0.0
      %740 = vmatpush1.msra.mxu0 0.0
      %741 = vmatprep.subr.mxu0 0.0
      %742 = vmatpush1.msra.mxu0 0.0
      %743 = vmatprep.subr.mxu0 0.0
      %744 = vmatpush1.msra.mxu0 0.0
      %745 = vmatprep.subr.mxu0 0.0
      %746 = vmatpush1.msra.mxu0 0.0
      %747 = vmatprep.subr.mxu0 0.0
      %748 = vmatpush1.msra.mxu0 0.0
      %749 = vmatprep.subr.mxu0 0.0
      %750 = vmatpush1.msra.mxu0 0.0
      %751 = vmatprep.subr.mxu0 0.0
      %752 = vmatpush1.msra.mxu0 0.0
      %753 = vmatprep.subr.mxu0 0.0
      %754 = vmatpush1.msra.mxu0 0.0
      %755 = vmatprep.subr.mxu0 0.0
      %756 = vmatpush1.msra.mxu0 0.0
      %757 = vmatprep.subr.mxu0 0.0
      %758 = vmatpush1.msra.mxu0 0.0
      %759 = vmatprep.subr.mxu0 0.0
      %760 = vmatpush1.msra.mxu0 0.0
      %761 = vmatprep.subr.mxu0 0.0
      %762 = vmatpush1.msra.mxu0 0.0
      %763 = vmatprep.subr.mxu0 0.0
      %764 = vmatpush1.msra.mxu0 0.0
      %765 = vmatprep.subr.mxu0 0.0
      %766 = vmatpush1.msra.mxu0 0.0
      %767 = vmatprep.mubr.f32.mxu0 0.0
      %v768 = vand.u32 %v414, 4294901760
      %v769 = vsub.f32 %v414, %v768
      %770 = vmatmul.mubr.f32.gmra.mrb[0].mxu0 %v769
      %v771 = vpop.f32.mrb[0].mxu0
      %v772 = vadd.f32 %v656, %v771
      %v773 = vpop.f32.mrb[0].mxu0
      %774 = vmatprep.mubr.f32.mxu0 0.0
      %v775 = vand.u32 %v417, 4294901760
      %v776 = vsub.f32 %v417, %v775
      %777 = vmatmul.mubr.f32.gmra.mrb[0].mxu0 %v776
      %v778 = vpop.f32.mrb[0].mxu0
      %v779 = vadd.f32 %v662, %v778
      %v780 = vpop.f32.mrb[0].mxu0
      %781 = vmatprep.mubr.f32.mxu0 0.0
      %v782 = vand.u32 %v420, 4294901760
      %v783 = vsub.f32 %v420, %v782
      %784 = vmatmul.mubr.f32.gmra.mrb[0].mxu0 %v783
      %v785 = vpop.f32.mrb[0].mxu0
      %v786 = vadd.f32 %v668, %v785
      %v787 = vpop.f32.mrb[0].mxu0
      %788 = vmatprep.mubr.f32.mxu0 0.0
      %v789 = vand.u32 %v423, 4294901760
      %v790 = vsub.f32 %v423, %v789
      %791 = vmatmul.mubr.f32.gmra.mrb[0].mxu0 %v790
      %v792 = vpop.f32.mrb[0].mxu0
      %v793 = vadd.f32 %v674, %v792
      %v794 = vpop.f32.mrb[0].mxu0
      %795 = vmatprep.mubr.f32.mxu0 0.0
      %v796 = vand.u32 %v426, 4294901760
      %v797 = vsub.f32 %v426, %v796
      %798 = vmatmul.mubr.f32.gmra.mrb[0].mxu0 %v797
      %v799 = vpop.f32.mrb[0].mxu0
      %v800 = vadd.f32 %v680, %v799
      %v801 = vpop.f32.mrb[0].mxu0
      %802 = vmatprep.mubr.f32.mxu0 0.0
      %v803 = vand.u32 %v429, 4294901760
      %v804 = vsub.f32 %v429, %v803
      %805 = vmatmul.mubr.f32.gmra.mrb[0].mxu0 %v804
      %v806 = vpop.f32.mrb[0].mxu0
      %v807 = vadd.f32 %v686, %v806
      %v808 = vpop.f32.mrb[0].mxu0
      %809 = vmatprep.mubr.f32.mxu0 0.0
      %v810 = vand.u32 %v432, 4294901760
      %v811 = vsub.f32 %v432, %v810
      %812 = vmatmul.mubr.f32.gmra.mrb[0].mxu0 %v811
      %v813 = vpop.f32.mrb[0].mxu0
      %v814 = vadd.f32 %v692, %v813
      %v815 = vpop.f32.mrb[0].mxu0
      %816 = vmatprep.mubr.f32.mxu0 0.0
      %v817 = vand.u32 %v435, 4294901760
      %v818 = vsub.f32 %v435, %v817
      %819 = vmatmul.mubr.f32.gmra.mrb[0].mxu0 %v818
      %v820 = vpop.f32.mrb[0].mxu0
      %v821 = vadd.f32 %v698, %v820
      %v822 = vpop.f32.mrb[0].mxu0
      %823 = vdwg.mxu0
      %824 = vmatprep.subr.mxu0 0.0
      %v825 = vand.u32 %v412, 4294901760
      %826 = vmatpush1.msra.mxu0 %v825
      %827 = vmatprep.subr.mxu0 0.0
      %828 = vmatpush1.msra.mxu0 0.0
      %829 = vmatprep.subr.mxu0 0.0
      %830 = vmatpush1.msra.mxu0 0.0
      %831 = vmatprep.subr.mxu0 0.0
      %832 = vmatpush1.msra.mxu0 0.0
      %833 = vmatprep.subr.mxu0 0.0
      %834 = vmatpush1.msra.mxu0 0.0
      %835 = vmatprep.subr.mxu0 0.0
      %836 = vmatpush1.msra.mxu0 0.0
      %837 = vmatprep.subr.mxu0 0.0
      %838 = vmatpush1.msra.mxu0 0.0
      %839 = vmatprep.subr.mxu0 0.0
      %840 = vmatpush1.msra.mxu0 0.0
      %841 = vmatprep.subr.mxu0 0.0
      %842 = vmatpush1.msra.mxu0 0.0
      %843 = vmatprep.subr.mxu0 0.0
      %844 = vmatpush1.msra.mxu0 0.0
      %845 = vmatprep.subr.mxu0 0.0
      %846 = vmatpush1.msra.mxu0 0.0
      %847 = vmatprep.subr.mxu0 0.0
      %848 = vmatpush1.msra.mxu0 0.0
      %849 = vmatprep.subr.mxu0 0.0
      %850 = vmatpush1.msra.mxu0 0.0
      %851 = vmatprep.subr.mxu0 0.0
      %852 = vmatpush1.msra.mxu0 0.0
      %853 = vmatprep.subr.mxu0 0.0
      %854 = vmatpush1.msra.mxu0 0.0
      %855 = vmatprep.subr.mxu0 0.0
      %856 = vmatpush1.msra.mxu0 0.0
      %857 = vmatprep.subr.mxu0 0.0
      %858 = vmatpush1.msra.mxu0 0.0
      %859 = vmatprep.subr.mxu0 0.0
      %860 = vmatpush1.msra.mxu0 0.0
      %861 = vmatprep.subr.mxu0 0.0
      %862 = vmatpush1.msra.mxu0 0.0
      %863 = vmatprep.subr.mxu0 0.0
      %864 = vmatpush1.msra.mxu0 0.0
      %865 = vmatprep.subr.mxu0 0.0
      %866 = vmatpush1.msra.mxu0 0.0
      %867 = vmatprep.subr.mxu0 0.0
      %868 = vmatpush1.msra.mxu0 0.0
      %869 = vmatprep.subr.mxu0 0.0
      %870 = vmatpush1.msra.mxu0 0.0
      %871 = vmatprep.subr.mxu0 0.0
      %872 = vmatpush1.msra.mxu0 0.0
      %873 = vmatprep.subr.mxu0 0.0
      %874 = vmatpush1.msra.mxu0 0.0
      %875 = vmatprep.subr.mxu0 0.0
      %876 = vmatpush1.msra.mxu0 0.0
      %877 = vmatprep.subr.mxu0 0.0
      %878 = vmatpush1.msra.mxu0 0.0
      %879 = vmatprep.subr.mxu0 0.0
      %880 = vmatpush1.msra.mxu0 0.0
      %881 = vmatprep.subr.mxu0 0.0
      %882 = vmatpush1.msra.mxu0 0.0
      %883 = vmatprep.subr.mxu0 0.0
      %884 = vmatpush1.msra.mxu0 0.0
      %885 = vmatprep.subr.mxu0 0.0
      %886 = vmatpush1.msra.mxu0 0.0
      %887 = vmatprep.subr.mxu0 0.0
      %888 = vmatpush1.msra.mxu0 0.0
      %889 = vmatprep.mubr.f32.mxu0 0.0
      %v890 = vand.u32 %v414, 4294901760
      %v891 = vsub.f32 %v414, %v890
      %v892 = vand.u32 %v891, 4294901760
      %893 = vmatmul.mubr.f32.gmra.mrb[0].mxu0 %v892
      %v894 = vpop.f32.mrb[0].mxu0
      %v895 = vadd.f32 %v772, %v894
      %v896 = vpop.f32.mrb[0].mxu0
      %897 = vmatprep.mubr.f32.mxu0 0.0
      %v898 = vand.u32 %v417, 4294901760
      %v899 = vsub.f32 %v417, %v898
      %v900 = vand.u32 %v899, 4294901760
      %901 = vmatmul.mubr.f32.gmra.mrb[0].mxu0 %v900
      %v902 = vpop.f32.mrb[0].mxu0
      %v903 = vadd.f32 %v779, %v902
      %v904 = vpop.f32.mrb[0].mxu0
      %905 = vmatprep.mubr.f32.mxu0 0.0
      %v906 = vand.u32 %v420, 4294901760
      %v907 = vsub.f32 %v420, %v906
      %v908 = vand.u32 %v907, 4294901760
      %909 = vmatmul.mubr.f32.gmra.mrb[0].mxu0 %v908
      %v910 = vpop.f32.mrb[0].mxu0
      %v911 = vadd.f32 %v786, %v910
      %v912 = vpop.f32.mrb[0].mxu0
      %913 = vmatprep.mubr.f32.mxu0 0.0
      %v914 = vand.u32 %v423, 4294901760
      %v915 = vsub.f32 %v423, %v914
      %v916 = vand.u32 %v915, 4294901760
      %917 = vmatmul.mubr.f32.gmra.mrb[0].mxu0 %v916
      %v918 = vpop.f32.mrb[0].mxu0
      %v919 = vadd.f32 %v793, %v918
      %v920 = vpop.f32.mrb[0].mxu0
      %921 = vmatprep.mubr.f32.mxu0 0.0
      %v922 = vand.u32 %v426, 4294901760
      %v923 = vsub.f32 %v426, %v922
      %v924 = vand.u32 %v923, 4294901760
      %925 = vmatmul.mubr.f32.gmra.mrb[0].mxu0 %v924
      %v926 = vpop.f32.mrb[0].mxu0
      %v927 = vadd.f32 %v800, %v926
      %v928 = vpop.f32.mrb[0].mxu0
      %929 = vmatprep.mubr.f32.mxu0 0.0
      %v930 = vand.u32 %v429, 4294901760
      %v931 = vsub.f32 %v429, %v930
      %v932 = vand.u32 %v931, 4294901760
      %933 = vmatmul.mubr.f32.gmra.mrb[0].mxu0 %v932
      %v934 = vpop.f32.mrb[0].mxu0
      %v935 = vadd.f32 %v807, %v934
      %v936 = vpop.f32.mrb[0].mxu0
      %937 = vmatprep.mubr.f32.mxu0 0.0
      %v938 = vand.u32 %v432, 4294901760
      %v939 = vsub.f32 %v432, %v938
      %v940 = vand.u32 %v939, 4294901760
      %941 = vmatmul.mubr.f32.gmra.mrb[0].mxu0 %v940
      %v942 = vpop.f32.mrb[0].mxu0
      %v943 = vadd.f32 %v814, %v942
      %v944 = vpop.f32.mrb[0].mxu0
      %945 = vmatprep.mubr.f32.mxu0 0.0
      %v946 = vand.u32 %v435, 4294901760
      %v947 = vsub.f32 %v435, %v946
      %v948 = vand.u32 %v947, 4294901760
      %949 = vmatmul.mubr.f32.gmra.mrb[0].mxu0 %v948
      %v950 = vpop.f32.mrb[0].mxu0
      %v951 = vadd.f32 %v821, %v950
      %v952 = vpop.f32.mrb[0].mxu0
      %953 = vdwg.mxu0
      %954 = vmatprep.subr.mxu0 0.0
      %v955 = vand.u32 %v412, 4294901760
      %v956 = vsub.f32 %v412, %v955
      %v957 = vand.u32 %v956, 4294901760
      %958 = vmatpush1.msra.mxu0 %v957
      %959 = vmatprep.subr.mxu0 0.0
      %960 = vmatpush1.msra.mxu0 0.0
      %961 = vmatprep.subr.mxu0 0.0
      %962 = vmatpush1.msra.mxu0 0.0
      %963 = vmatprep.subr.mxu0 0.0
      %964 = vmatpush1.msra.mxu0 0.0
      %965 = vmatprep.subr.mxu0 0.0
      %966 = vmatpush1.msra.mxu0 0.0
      %967 = vmatprep.subr.mxu0 0.0
      %968 = vmatpush1.msra.mxu0 0.0
      %969 = vmatprep.subr.mxu0 0.0
      %970 = vmatpush1.msra.mxu0 0.0
      %971 = vmatprep.subr.mxu0 0.0
      %972 = vmatpush1.msra.mxu0 0.0
      %973 = vmatprep.subr.mxu0 0.0
      %974 = vmatpush1.msra.mxu0 0.0
      %975 = vmatprep.subr.mxu0 0.0
      %976 = vmatpush1.msra.mxu0 0.0
      %977 = vmatprep.subr.mxu0 0.0
      %978 = vmatpush1.msra.mxu0 0.0
      %979 = vmatprep.subr.mxu0 0.0
      %980 = vmatpush1.msra.mxu0 0.0
      %981 = vmatprep.subr.mxu0 0.0
      %982 = vmatpush1.msra.mxu0 0.0
      %983 = vmatprep.subr.mxu0 0.0
      %984 = vmatpush1.msra.mxu0 0.0
      %985 = vmatprep.subr.mxu0 0.0
      %986 = vmatpush1.msra.mxu0 0.0
      %987 = vmatprep.subr.mxu0 0.0
      %988 = vmatpush1.msra.mxu0 0.0
      %989 = vmatprep.subr.mxu0 0.0
      %990 = vmatpush1.msra.mxu0 0.0
      %991 = vmatprep.subr.mxu0 0.0
      %992 = vmatpush1.msra.mxu0 0.0
      %993 = vmatprep.subr.mxu0 0.0
      %994 = vmatpush1.msra.mxu0 0.0
      %995 = vmatprep.subr.mxu0 0.0
      %996 = vmatpush1.msra.mxu0 0.0
      %997 = vmatprep.subr.mxu0 0.0
      %998 = vmatpush1.msra.mxu0 0.0
      %999 = vmatprep.subr.mxu0 0.0
      %1000 = vmatpush1.msra.mxu0 0.0
      %1001 = vmatprep.subr.mxu0 0.0
      %1002 = vmatpush1.msra.mxu0 0.0
      %1003 = vmatprep.subr.mxu0 0.0
      %1004 = vmatpush1.msra.mxu0 0.0
      %1005 = vmatprep.subr.mxu0 0.0
      %1006 = vmatpush1.msra.mxu0 0.0
      %1007 = vmatprep.subr.mxu0 0.0
      %1008 = vmatpush1.msra.mxu0 0.0
      %1009 = vmatprep.subr.mxu0 0.0
      %1010 = vmatpush1.msra.mxu0 0.0
      %1011 = vmatprep.subr.mxu0 0.0
      %1012 = vmatpush1.msra.mxu0 0.0
      %1013 = vmatprep.subr.mxu0 0.0
      %1014 = vmatpush1.msra.mxu0 0.0
      %1015 = vmatprep.subr.mxu0 0.0
      %1016 = vmatpush1.msra.mxu0 0.0
      %1017 = vmatprep.subr.mxu0 0.0
      %1018 = vmatpush1.msra.mxu0 0.0
      %1019 = vmatprep.subr.mxu0 0.0
      %1020 = vmatpush1.msra.mxu0 0.0
      %1021 = vmatprep.mubr.f32.mxu0 0.0
      %v1022 = vand.u32 %v414, 4294901760
      %1023 = vmatmul.mubr.f32.gmra.mrb[0].mxu0 %v1022
      %v1024 = vpop.f32.mrb[0].mxu0
      %v1025 = vadd.f32 %v895, %v1024
      %v1026 = vpop.f32.mrb[0].mxu0
      %1027 = vmatprep.mubr.f32.mxu0 0.0
      %v1028 = vand.u32 %v417, 4294901760
      %1029 = vmatmul.mubr.f32.gmra.mrb[0].mxu0 %v1028
      %v1030 = vpop.f32.mrb[0].mxu0
      %v1031 = vadd.f32 %v903, %v1030
      %v1032 = vpop.f32.mrb[0].mxu0
      %1033 = vmatprep.mubr.f32.mxu0 0.0
      %v1034 = vand.u32 %v420, 4294901760
      %1035 = vmatmul.mubr.f32.gmra.mrb[0].mxu0 %v1034
      %v1036 = vpop.f32.mrb[0].mxu0
      %v1037 = vadd.f32 %v911, %v1036
      %v1038 = vpop.f32.mrb[0].mxu0
      %1039 = vmatprep.mubr.f32.mxu0 0.0
      %v1040 = vand.u32 %v423, 4294901760
      %1041 = vmatmul.mubr.f32.gmra.mrb[0].mxu0 %v1040
      %v1042 = vpop.f32.mrb[0].mxu0
      %v1043 = vadd.f32 %v919, %v1042
      %v1044 = vpop.f32.mrb[0].mxu0
      %1045 = vmatprep.mubr.f32.mxu0 0.0
      %v1046 = vand.u32 %v426, 4294901760
      %1047 = vmatmul.mubr.f32.gmra.mrb[0].mxu0 %v1046
      %v1048 = vpop.f32.mrb[0].mxu0
      %v1049 = vadd.f32 %v927, %v1048
      %v1050 = vpop.f32.mrb[0].mxu0
      %1051 = vmatprep.mubr.f32.mxu0 0.0
      %v1052 = vand.u32 %v429, 4294901760
      %1053 = vmatmul.mubr.f32.gmra.mrb[0].mxu0 %v1052
      %v1054 = vpop.f32.mrb[0].mxu0
      %v1055 = vadd.f32 %v935, %v1054
      %v1056 = vpop.f32.mrb[0].mxu0
      %1057 = vmatprep.mubr.f32.mxu0 0.0
      %v1058 = vand.u32 %v432, 4294901760
      %1059 = vmatmul.mubr.f32.gmra.mrb[0].mxu0 %v1058
      %v1060 = vpop.f32.mrb[0].mxu0
      %v1061 = vadd.f32 %v943, %v1060
      %v1062 = vpop.f32.mrb[0].mxu0
      %1063 = vmatprep.mubr.f32.mxu0 0.0
      %v1064 = vand.u32 %v435, 4294901760
      %1065 = vmatmul.mubr.f32.gmra.mrb[0].mxu0 %v1064
      %v1066 = vpop.f32.mrb[0].mxu0
      %v1067 = vadd.f32 %v951, %v1066
      %v1068 = vpop.f32.mrb[0].mxu0
      %1069 = vdwg.mxu0
      %1070 = vmatprep.subr.mxu0 0.0
      %v1071 = vand.u32 %v412, 4294901760
      %1072 = vmatpush1.msra.mxu0 %v1071
      %1073 = vmatprep.subr.mxu0 0.0
      %1074 = vmatpush1.msra.mxu0 0.0
      %1075 = vmatprep.subr.mxu0 0.0
      %1076 = vmatpush1.msra.mxu0 0.0
      %1077 = vmatprep.subr.mxu0 0.0
      %1078 = vmatpush1.msra.mxu0 0.0
      %1079 = vmatprep.subr.mxu0 0.0
      %1080 = vmatpush1.msra.mxu0 0.0
      %1081 = vmatprep.subr.mxu0 0.0
      %1082 = vmatpush1.msra.mxu0 0.0
      %1083 = vmatprep.subr.mxu0 0.0
      %1084 = vmatpush1.msra.mxu0 0.0
      %1085 = vmatprep.subr.mxu0 0.0
      %1086 = vmatpush1.msra.mxu0 0.0
      %1087 = vmatprep.subr.mxu0 0.0
      %1088 = vmatpush1.msra.mxu0 0.0
      %1089 = vmatprep.subr.mxu0 0.0
      %1090 = vmatpush1.msra.mxu0 0.0
      %1091 = vmatprep.subr.mxu0 0.0
      %1092 = vmatpush1.msra.mxu0 0.0
      %1093 = vmatprep.subr.mxu0 0.0
      %1094 = vmatpush1.msra.mxu0 0.0
      %1095 = vmatprep.subr.mxu0 0.0
      %1096 = vmatpush1.msra.mxu0 0.0
      %1097 = vmatprep.subr.mxu0 0.0
      %1098 = vmatpush1.msra.mxu0 0.0
      %1099 = vmatprep.subr.mxu0 0.0
      %1100 = vmatpush1.msra.mxu0 0.0
      %1101 = vmatprep.subr.mxu0 0.0
      %1102 = vmatpush1.msra.mxu0 0.0
      %1103 = vmatprep.subr.mxu0 0.0
      %1104 = vmatpush1.msra.mxu0 0.0
      %1105 = vmatprep.subr.mxu0 0.0
      %1106 = vmatpush1.msra.mxu0 0.0
      %1107 = vmatprep.subr.mxu0 0.0
      %1108 = vmatpush1.msra.mxu0 0.0
      %1109 = vmatprep.subr.mxu0 0.0
      %1110 = vmatpush1.msra.mxu0 0.0
      %1111 = vmatprep.subr.mxu0 0.0
      %1112 = vmatpush1.msra.mxu0 0.0
      %1113 = vmatprep.subr.mxu0 0.0
      %1114 = vmatpush1.msra.mxu0 0.0
      %1115 = vmatprep.subr.mxu0 0.0
      %1116 = vmatpush1.msra.mxu0 0.0
      %1117 = vmatprep.subr.mxu0 0.0
      %1118 = vmatpush1.msra.mxu0 0.0
      %1119 = vmatprep.subr.mxu0 0.0
      %1120 = vmatpush1.msra.mxu0 0.0
      %1121 = vmatprep.subr.mxu0 0.0
      %1122 = vmatpush1.msra.mxu0 0.0
      %1123 = vmatprep.subr.mxu0 0.0
      %1124 = vmatpush1.msra.mxu0 0.0
      %1125 = vmatprep.subr.mxu0 0.0
      %1126 = vmatpush1.msra.mxu0 0.0
      %1127 = vmatprep.subr.mxu0 0.0
      %1128 = vmatpush1.msra.mxu0 0.0
      %1129 = vmatprep.subr.mxu0 0.0
      %1130 = vmatpush1.msra.mxu0 0.0
      %1131 = vmatprep.subr.mxu0 0.0
      %1132 = vmatpush1.msra.mxu0 0.0
      %1133 = vmatprep.subr.mxu0 0.0
      %1134 = vmatpush1.msra.mxu0 0.0
      %1135 = vmatprep.mubr.f32.mxu0 0.0
      %v1136 = vand.u32 %v414, 4294901760
      %1137 = vmatmul.mubr.f32.gmra.mrb[0].mxu0 %v1136
      %v1138 = vpop.f32.mrb[0].mxu0
      %v1139 = vadd.f32 %v1025, %v1138
      %v1140 = vpop.f32.mrb[0].mxu0
      %1141 = vmatprep.mubr.f32.mxu0 0.0
      %v1142 = vand.u32 %v417, 4294901760
      %1143 = vmatmul.mubr.f32.gmra.mrb[0].mxu0 %v1142
      %v1144 = vpop.f32.mrb[0].mxu0
      %v1145 = vadd.f32 %v1031, %v1144
      %v1146 = vpop.f32.mrb[0].mxu0
      %1147 = vmatprep.mubr.f32.mxu0 0.0
      %v1148 = vand.u32 %v420, 4294901760
      %1149 = vmatmul.mubr.f32.gmra.mrb[0].mxu0 %v1148
      %v1150 = vpop.f32.mrb[0].mxu0
      %v1151 = vadd.f32 %v1037, %v1150
      %v1152 = vpop.f32.mrb[0].mxu0
      %1153 = vmatprep.mubr.f32.mxu0 0.0
      %v1154 = vand.u32 %v423, 4294901760
      %1155 = vmatmul.mubr.f32.gmra.mrb[0].mxu0 %v1154
      %v1156 = vpop.f32.mrb[0].mxu0
      %v1157 = vadd.f32 %v1043, %v1156
      %v1158 = vpop.f32.mrb[0].mxu0
      %1159 = vmatprep.mubr.f32.mxu0 0.0
      %v1160 = vand.u32 %v426, 4294901760
      %1161 = vmatmul.mubr.f32.gmra.mrb[0].mxu0 %v1160
      %v1162 = vpop.f32.mrb[0].mxu0
      %v1163 = vadd.f32 %v1049, %v1162
      %v1164 = vpop.f32.mrb[0].mxu0
      %1165 = vmatprep.mubr.f32.mxu0 0.0
      %v1166 = vand.u32 %v429, 4294901760
      %1167 = vmatmul.mubr.f32.gmra.mrb[0].mxu0 %v1166
      %v1168 = vpop.f32.mrb[0].mxu0
      %v1169 = vadd.f32 %v1055, %v1168
      %v1170 = vpop.f32.mrb[0].mxu0
      %1171 = vmatprep.mubr.f32.mxu0 0.0
      %v1172 = vand.u32 %v432, 4294901760
      %1173 = vmatmul.mubr.f32.gmra.mrb[0].mxu0 %v1172
      %v1174 = vpop.f32.mrb[0].mxu0
      %v1175 = vadd.f32 %v1061, %v1174
      %v1176 = vpop.f32.mrb[0].mxu0
      %1177 = vmatprep.mubr.f32.mxu0 0.0
      %v1178 = vand.u32 %v435, 4294901760
      %1179 = vmatmul.mubr.f32.gmra.mrb[0].mxu0 %v1178
      %v1180 = vpop.f32.mrb[0].mxu0
      %v1181 = vadd.f32 %v1067, %v1180
      %v1182 = vpop.f32.mrb[0].mxu0
      %1183 = vdwg.mxu0
      %v1185 = vsel %vm193, %v386, 0
      %v1188 = vsel %vm193, %v387, 0
      %v1191 = vsel %vm193, %v388, 0
      %v1194 = vsel %vm193, %v389, 0
      %v1197 = vsel %vm193, %v390, 0
      %v1200 = vsel %vm193, %v391, 0
      %v1203 = vsel %vm193, %v392, 0
      %v1206 = vsel %vm193, %v393, 0
      %1208 = vmatprep.subr.mxu0 0.0
      %v1209 = vand.u32 %v410, 4294901760
      %1210 = vmatpush1.msra.mxu0 %v1209
      %1211 = vmatprep.subr.mxu0 0.0
      %1212 = vmatpush1.msra.mxu0 0.0
      %1213 = vmatprep.subr.mxu0 0.0
      %1214 = vmatpush1.msra.mxu0 0.0
      %1215 = vmatprep.subr.mxu0 0.0
      %1216 = vmatpush1.msra.mxu0 0.0
      %1217 = vmatprep.subr.mxu0 0.0
      %1218 = vmatpush1.msra.mxu0 0.0
      %1219 = vmatprep.subr.mxu0 0.0
      %1220 = vmatpush1.msra.mxu0 0.0
      %1221 = vmatprep.subr.mxu0 0.0
      %1222 = vmatpush1.msra.mxu0 0.0
      %1223 = vmatprep.subr.mxu0 0.0
      %1224 = vmatpush1.msra.mxu0 0.0
      %1225 = vmatprep.subr.mxu0 0.0
      %1226 = vmatpush1.msra.mxu0 0.0
      %1227 = vmatprep.subr.mxu0 0.0
      %1228 = vmatpush1.msra.mxu0 0.0
      %1229 = vmatprep.subr.mxu0 0.0
      %1230 = vmatpush1.msra.mxu0 0.0
      %1231 = vmatprep.subr.mxu0 0.0
      %1232 = vmatpush1.msra.mxu0 0.0
      %1233 = vmatprep.subr.mxu0 0.0
      %1234 = vmatpush1.msra.mxu0 0.0
      %1235 = vmatprep.subr.mxu0 0.0
      %1236 = vmatpush1.msra.mxu0 0.0
      %1237 = vmatprep.subr.mxu0 0.0
      %1238 = vmatpush1.msra.mxu0 0.0
      %1239 = vmatprep.subr.mxu0 0.0
      %1240 = vmatpush1.msra.mxu0 0.0
      %1241 = vmatprep.subr.mxu0 0.0
      %1242 = vmatpush1.msra.mxu0 0.0
      %1243 = vmatprep.subr.mxu0 0.0
      %1244 = vmatpush1.msra.mxu0 0.0
      %1245 = vmatprep.subr.mxu0 0.0
      %1246 = vmatpush1.msra.mxu0 0.0
      %1247 = vmatprep.subr.mxu0 0.0
      %1248 = vmatpush1.msra.mxu0 0.0
      %1249 = vmatprep.subr.mxu0 0.0
      %1250 = vmatpush1.msra.mxu0 0.0
      %1251 = vmatprep.subr.mxu0 0.0
      %1252 = vmatpush1.msra.mxu0 0.0
      %1253 = vmatprep.subr.mxu0 0.0
      %1254 = vmatpush1.msra.mxu0 0.0
      %1255 = vmatprep.subr.mxu0 0.0
      %1256 = vmatpush1.msra.mxu0 0.0
      %1257 = vmatprep.subr.mxu0 0.0
      %1258 = vmatpush1.msra.mxu0 0.0
      %1259 = vmatprep.subr.mxu0 0.0
      %1260 = vmatpush1.msra.mxu0 0.0
      %1261 = vmatprep.subr.mxu0 0.0
      %1262 = vmatpush1.msra.mxu0 0.0
      %1263 = vmatprep.subr.mxu0 0.0
      %1264 = vmatpush1.msra.mxu0 0.0
      %1265 = vmatprep.subr.mxu0 0.0
      %1266 = vmatpush1.msra.mxu0 0.0
      %1267 = vmatprep.subr.mxu0 0.0
      %1268 = vmatpush1.msra.mxu0 0.0
      %1269 = vmatprep.subr.mxu0 0.0
      %1270 = vmatpush1.msra.mxu0 0.0
      %1271 = vmatprep.subr.mxu0 0.0
      %1272 = vmatpush1.msra.mxu0 0.0
      %1273 = vmatprep.mubr.f32.mxu0 0.0
      %v1274 = vand.u32 %v1185, 4294901760
      %v1275 = vsub.f32 %v1185, %v1274
      %v1276 = vand.u32 %v1275, 4294901760
      %v1277 = vsub.f32 %v1275, %v1276
      %v1278 = vand.u32 %v1277, 4294901760
      %1279 = vmatmul.mubr.f32.gmra.mrb[0].mxu0 %v1278
      %v1280 = vpop.f32.mrb[0].mxu0
      %v1281 = vadd.f32 %v1139, %v1280
      %v1282 = vpop.f32.mrb[0].mxu0
      %1283 = vmatprep.mubr.f32.mxu0 0.0
      %v1284 = vand.u32 %v1188, 4294901760
      %v1285 = vsub.f32 %v1188, %v1284
      %v1286 = vand.u32 %v1285, 4294901760
      %v1287 = vsub.f32 %v1285, %v1286
      %v1288 = vand.u32 %v1287, 4294901760
      %1289 = vmatmul.mubr.f32.gmra.mrb[0].mxu0 %v1288
      %v1290 = vpop.f32.mrb[0].mxu0
      %v1291 = vadd.f32 %v1145, %v1290
      %v1292 = vpop.f32.mrb[0].mxu0
      %1293 = vmatprep.mubr.f32.mxu0 0.0
      %v1294 = vand.u32 %v1191, 4294901760
      %v1295 = vsub.f32 %v1191, %v1294
      %v1296 = vand.u32 %v1295, 4294901760
      %v1297 = vsub.f32 %v1295, %v1296
      %v1298 = vand.u32 %v1297, 4294901760
      %1299 = vmatmul.mubr.f32.gmra.mrb[0].mxu0 %v1298
      %v1300 = vpop.f32.mrb[0].mxu0
      %v1301 = vadd.f32 %v1151, %v1300
      %v1302 = vpop.f32.mrb[0].mxu0
      %1303 = vmatprep.mubr.f32.mxu0 0.0
      %v1304 = vand.u32 %v1194, 4294901760
      %v1305 = vsub.f32 %v1194, %v1304
      %v1306 = vand.u32 %v1305, 4294901760
      %v1307 = vsub.f32 %v1305, %v1306
      %v1308 = vand.u32 %v1307, 4294901760
      %1309 = vmatmul.mubr.f32.gmra.mrb[0].mxu0 %v1308
      %v1310 = vpop.f32.mrb[0].mxu0
      %v1311 = vadd.f32 %v1157, %v1310
      %v1312 = vpop.f32.mrb[0].mxu0
      %1313 = vmatprep.mubr.f32.mxu0 0.0
      %v1314 = vand.u32 %v1197, 4294901760
      %v1315 = vsub.f32 %v1197, %v1314
      %v1316 = vand.u32 %v1315, 4294901760
      %v1317 = vsub.f32 %v1315, %v1316
      %v1318 = vand.u32 %v1317, 4294901760
      %1319 = vmatmul.mubr.f32.gmra.mrb[0].mxu0 %v1318
      %v1320 = vpop.f32.mrb[0].mxu0
      %v1321 = vadd.f32 %v1163, %v1320
      %v1322 = vpop.f32.mrb[0].mxu0
      %1323 = vmatprep.mubr.f32.mxu0 0.0
      %v1324 = vand.u32 %v1200, 4294901760
      %v1325 = vsub.f32 %v1200, %v1324
      %v1326 = vand.u32 %v1325, 4294901760
      %v1327 = vsub.f32 %v1325, %v1326
      %v1328 = vand.u32 %v1327, 4294901760
      %1329 = vmatmul.mubr.f32.gmra.mrb[0].mxu0 %v1328
      %v1330 = vpop.f32.mrb[0].mxu0
      %v1331 = vadd.f32 %v1169, %v1330
      %v1332 = vpop.f32.mrb[0].mxu0
      %1333 = vmatprep.mubr.f32.mxu0 0.0
      %v1334 = vand.u32 %v1203, 4294901760
      %v1335 = vsub.f32 %v1203, %v1334
      %v1336 = vand.u32 %v1335, 4294901760
      %v1337 = vsub.f32 %v1335, %v1336
      %v1338 = vand.u32 %v1337, 4294901760
      %1339 = vmatmul.mubr.f32.gmra.mrb[0].mxu0 %v1338
      %v1340 = vpop.f32.mrb[0].mxu0
      %v1341 = vadd.f32 %v1175, %v1340
      %v1342 = vpop.f32.mrb[0].mxu0
      %1343 = vmatprep.mubr.f32.mxu0 0.0
      %v1344 = vand.u32 %v1206, 4294901760
      %v1345 = vsub.f32 %v1206, %v1344
      %v1346 = vand.u32 %v1345, 4294901760
      %v1347 = vsub.f32 %v1345, %v1346
      %v1348 = vand.u32 %v1347, 4294901760
      %1349 = vmatmul.mubr.f32.gmra.mrb[0].mxu0 %v1348
      %v1350 = vpop.f32.mrb[0].mxu0
      %v1351 = vadd.f32 %v1181, %v1350
      %v1352 = vpop.f32.mrb[0].mxu0
      %1353 = vdwg.mxu0
      %1354 = vmatprep.subr.mxu0 0.0
      %v1355 = vand.u32 %v410, 4294901760
      %v1356 = vsub.f32 %v410, %v1355
      %v1357 = vand.u32 %v1356, 4294901760
      %v1358 = vsub.f32 %v1356, %v1357
      %v1359 = vand.u32 %v1358, 4294901760
      %1360 = vmatpush1.msra.mxu0 %v1359
      %1361 = vmatprep.subr.mxu0 0.0
      %1362 = vmatpush1.msra.mxu0 0.0
      %1363 = vmatprep.subr.mxu0 0.0
      %1364 = vmatpush1.msra.mxu0 0.0
      %1365 = vmatprep.subr.mxu0 0.0
      %1366 = vmatpush1.msra.mxu0 0.0
      %1367 = vmatprep.subr.mxu0 0.0
      %1368 = vmatpush1.msra.mxu0 0.0
      %1369 = vmatprep.subr.mxu0 0.0
      %1370 = vmatpush1.msra.mxu0 0.0
      %1371 = vmatprep.subr.mxu0 0.0
      %1372 = vmatpush1.msra.mxu0 0.0
      %1373 = vmatprep.subr.mxu0 0.0
      %1374 = vmatpush1.msra.mxu0 0.0
      %1375 = vmatprep.subr.mxu0 0.0
      %1376 = vmatpush1.msra.mxu0 0.0
      %1377 = vmatprep.subr.mxu0 0.0
      %1378 = vmatpush1.msra.mxu0 0.0
      %1379 = vmatprep.subr.mxu0 0.0
      %1380 = vmatpush1.msra.mxu0 0.0
      %1381 = vmatprep.subr.mxu0 0.0
      %1382 = vmatpush1.msra.mxu0 0.0
      %1383 = vmatprep.subr.mxu0 0.0
      %1384 = vmatpush1.msra.mxu0 0.0
      %1385 = vmatprep.subr.mxu0 0.0
      %1386 = vmatpush1.msra.mxu0 0.0
      %1387 = vmatprep.subr.mxu0 0.0
      %1388 = vmatpush1.msra.mxu0 0.0
      %1389 = vmatprep.subr.mxu0 0.0
      %1390 = vmatpush1.msra.mxu0 0.0
      %1391 = vmatprep.subr.mxu0 0.0
      %1392 = vmatpush1.msra.mxu0 0.0
      %1393 = vmatprep.subr.mxu0 0.0
      %1394 = vmatpush1.msra.mxu0 0.0
      %1395 = vmatprep.subr.mxu0 0.0
      %1396 = vmatpush1.msra.mxu0 0.0
      %1397 = vmatprep.subr.mxu0 0.0
      %1398 = vmatpush1.msra.mxu0 0.0
      %1399 = vmatprep.subr.mxu0 0.0
      %1400 = vmatpush1.msra.mxu0 0.0
      %1401 = vmatprep.subr.mxu0 0.0
      %1402 = vmatpush1.msra.mxu0 0.0
      %1403 = vmatprep.subr.mxu0 0.0
      %1404 = vmatpush1.msra.mxu0 0.0
      %1405 = vmatprep.subr.mxu0 0.0
      %1406 = vmatpush1.msra.mxu0 0.0
      %1407 = vmatprep.subr.mxu0 0.0
      %1408 = vmatpush1.msra.mxu0 0.0
      %1409 = vmatprep.subr.mxu0 0.0
      %1410 = vmatpush1.msra.mxu0 0.0
      %1411 = vmatprep.subr.mxu0 0.0
      %1412 = vmatpush1.msra.mxu0 0.0
      %1413 = vmatprep.subr.mxu0 0.0
      %1414 = vmatpush1.msra.mxu0 0.0
      %1415 = vmatprep.subr.mxu0 0.0
      %1416 = vmatpush1.msra.mxu0 0.0
      %1417 = vmatprep.subr.mxu0 0.0
      %1418 = vmatpush1.msra.mxu0 0.0
      %1419 = vmatprep.subr.mxu0 0.0
      %1420 = vmatpush1.msra.mxu0 0.0
      %1421 = vmatprep.subr.mxu0 0.0
      %1422 = vmatpush1.msra.mxu0 0.0
      %1423 = vmatprep.mubr.f32.mxu0 0.0
      %v1424 = vand.u32 %v1185, 4294901760
      %1425 = vmatmul.mubr.f32.gmra.mrb[0].mxu0 %v1424
      %v1426 = vpop.f32.mrb[0].mxu0
      %v1427 = vadd.f32 %v1281, %v1426
      %v1428 = vpop.f32.mrb[0].mxu0
      %1429 = vmatprep.mubr.f32.mxu0 0.0
      %v1430 = vand.u32 %v1188, 4294901760
      %1431 = vmatmul.mubr.f32.gmra.mrb[0].mxu0 %v1430
      %v1432 = vpop.f32.mrb[0].mxu0
      %v1433 = vadd.f32 %v1291, %v1432
      %v1434 = vpop.f32.mrb[0].mxu0
      %1435 = vmatprep.mubr.f32.mxu0 0.0
      %v1436 = vand.u32 %v1191, 4294901760
      %1437 = vmatmul.mubr.f32.gmra.mrb[0].mxu0 %v1436
      %v1438 = vpop.f32.mrb[0].mxu0
      %v1439 = vadd.f32 %v1301, %v1438
      %v1440 = vpop.f32.mrb[0].mxu0
      %1441 = vmatprep.mubr.f32.mxu0 0.0
      %v1442 = vand.u32 %v1194, 4294901760
      %1443 = vmatmul.mubr.f32.gmra.mrb[0].mxu0 %v1442
      %v1444 = vpop.f32.mrb[0].mxu0
      %v1445 = vadd.f32 %v1311, %v1444
      %v1446 = vpop.f32.mrb[0].mxu0
      %1447 = vmatprep.mubr.f32.mxu0 0.0
      %v1448 = vand.u32 %v1197, 4294901760
      %1449 = vmatmul.mubr.f32.gmra.mrb[0].mxu0 %v1448
      %v1450 = vpop.f32.mrb[0].mxu0
      %v1451 = vadd.f32 %v1321, %v1450
      %v1452 = vpop.f32.mrb[0].mxu0
      %1453 = vmatprep.mubr.f32.mxu0 0.0
      %v1454 = vand.u32 %v1200, 4294901760
      %1455 = vmatmul.mubr.f32.gmra.mrb[0].mxu0 %v1454
      %v1456 = vpop.f32.mrb[0].mxu0
      %v1457 = vadd.f32 %v1331, %v1456
      %v1458 = vpop.f32.mrb[0].mxu0
      %1459 = vmatprep.mubr.f32.mxu0 0.0
      %v1460 = vand.u32 %v1203, 4294901760
      %1461 = vmatmul.mubr.f32.gmra.mrb[0].mxu0 %v1460
      %v1462 = vpop.f32.mrb[0].mxu0
      %v1463 = vadd.f32 %v1341, %v1462
      %v1464 = vpop.f32.mrb[0].mxu0
      %1465 = vmatprep.mubr.f32.mxu0 0.0
      %v1466 = vand.u32 %v1206, 4294901760
      %1467 = vmatmul.mubr.f32.gmra.mrb[0].mxu0 %v1466
      %v1468 = vpop.f32.mrb[0].mxu0
      %v1469 = vadd.f32 %v1351, %v1468
      %v1470 = vpop.f32.mrb[0].mxu0
      %1471 = vdwg.mxu0
      %1472 = vmatprep.subr.mxu0 0.0
      %v1473 = vand.u32 %v410, 4294901760
      %v1474 = vsub.f32 %v410, %v1473
      %1475 = vmatpush1.msra.mxu0 %v1474
      %1476 = vmatprep.subr.mxu0 0.0
      %1477 = vmatpush1.msra.mxu0 0.0
      %1478 = vmatprep.subr.mxu0 0.0
      %1479 = vmatpush1.msra.mxu0 0.0
      %1480 = vmatprep.subr.mxu0 0.0
      %1481 = vmatpush1.msra.mxu0 0.0
      %1482 = vmatprep.subr.mxu0 0.0
      %1483 = vmatpush1.msra.mxu0 0.0
      %1484 = vmatprep.subr.mxu0 0.0
      %1485 = vmatpush1.msra.mxu0 0.0
      %1486 = vmatprep.subr.mxu0 0.0
      %1487 = vmatpush1.msra.mxu0 0.0
      %1488 = vmatprep.subr.mxu0 0.0
      %1489 = vmatpush1.msra.mxu0 0.0
      %1490 = vmatprep.subr.mxu0 0.0
      %1491 = vmatpush1.msra.mxu0 0.0
      %1492 = vmatprep.subr.mxu0 0.0
      %1493 = vmatpush1.msra.mxu0 0.0
      %1494 = vmatprep.subr.mxu0 0.0
      %1495 = vmatpush1.msra.mxu0 0.0
      %1496 = vmatprep.subr.mxu0 0.0
      %1497 = vmatpush1.msra.mxu0 0.0
      %1498 = vmatprep.subr.mxu0 0.0
      %1499 = vmatpush1.msra.mxu0 0.0
      %1500 = vmatprep.subr.mxu0 0.0
      %1501 = vmatpush1.msra.mxu0 0.0
      %1502 = vmatprep.subr.mxu0 0.0
      %1503 = vmatpush1.msra.mxu0 0.0
      %1504 = vmatprep.subr.mxu0 0.0
      %1505 = vmatpush1.msra.mxu0 0.0
      %1506 = vmatprep.subr.mxu0 0.0
      %1507 = vmatpush1.msra.mxu0 0.0
      %1508 = vmatprep.subr.mxu0 0.0
      %1509 = vmatpush1.msra.mxu0 0.0
      %1510 = vmatprep.subr.mxu0 0.0
      %1511 = vmatpush1.msra.mxu0 0.0
      %1512 = vmatprep.subr.mxu0 0.0
      %1513 = vmatpush1.msra.mxu0 0.0
      %1514 = vmatprep.subr.mxu0 0.0
      %1515 = vmatpush1.msra.mxu0 0.0
      %1516 = vmatprep.subr.mxu0 0.0
      %1517 = vmatpush1.msra.mxu0 0.0
      %1518 = vmatprep.subr.mxu0 0.0
      %1519 = vmatpush1.msra.mxu0 0.0
      %1520 = vmatprep.subr.mxu0 0.0
      %1521 = vmatpush1.msra.mxu0 0.0
      %1522 = vmatprep.subr.mxu0 0.0
      %1523 = vmatpush1.msra.mxu0 0.0
      %1524 = vmatprep.subr.mxu0 0.0
      %1525 = vmatpush1.msra.mxu0 0.0
      %1526 = vmatprep.subr.mxu0 0.0
      %1527 = vmatpush1.msra.mxu0 0.0
      %1528 = vmatprep.subr.mxu0 0.0
      %1529 = vmatpush1.msra.mxu0 0.0
      %1530 = vmatprep.subr.mxu0 0.0
      %1531 = vmatpush1.msra.mxu0 0.0
      %1532 = vmatprep.subr.mxu0 0.0
      %1533 = vmatpush1.msra.mxu0 0.0
      %1534 = vmatprep.subr.mxu0 0.0
      %1535 = vmatpush1.msra.mxu0 0.0
      %1536 = vmatprep.subr.mxu0 0.0
      %1537 = vmatpush1.msra.mxu0 0.0
      %1538 = vmatprep.mubr.f32.mxu0 0.0
      %v1539 = vand.u32 %v1185, 4294901760
      %v1540 = vsub.f32 %v1185, %v1539
      %1541 = vmatmul.mubr.f32.gmra.mrb[0].mxu0 %v1540
      %v1542 = vpop.f32.mrb[0].mxu0
      %v1543 = vadd.f32 %v1427, %v1542
      %v1544 = vpop.f32.mrb[0].mxu0
      %1545 = vmatprep.mubr.f32.mxu0 0.0
      %v1546 = vand.u32 %v1188, 4294901760
      %v1547 = vsub.f32 %v1188, %v1546
      %1548 = vmatmul.mubr.f32.gmra.mrb[0].mxu0 %v1547
      %v1549 = vpop.f32.mrb[0].mxu0
      %v1550 = vadd.f32 %v1433, %v1549
      %v1551 = vpop.f32.mrb[0].mxu0
      %1552 = vmatprep.mubr.f32.mxu0 0.0
      %v1553 = vand.u32 %v1191, 4294901760
      %v1554 = vsub.f32 %v1191, %v1553
      %1555 = vmatmul.mubr.f32.gmra.mrb[0].mxu0 %v1554
      %v1556 = vpop.f32.mrb[0].mxu0
      %v1557 = vadd.f32 %v1439, %v1556
      %v1558 = vpop.f32.mrb[0].mxu0
      %1559 = vmatprep.mubr.f32.mxu0 0.0
      %v1560 = vand.u32 %v1194, 4294901760
      %v1561 = vsub.f32 %v1194, %v1560
      %1562 = vmatmul.mubr.f32.gmra.mrb[0].mxu0 %v1561
      %v1563 = vpop.f32.mrb[0].mxu0
      %v1564 = vadd.f32 %v1445, %v1563
      %v1565 = vpop.f32.mrb[0].mxu0
      %1566 = vmatprep.mubr.f32.mxu0 0.0
      %v1567 = vand.u32 %v1197, 4294901760
      %v1568 = vsub.f32 %v1197, %v1567
      %1569 = vmatmul.mubr.f32.gmra.mrb[0].mxu0 %v1568
      %v1570 = vpop.f32.mrb[0].mxu0
      %v1571 = vadd.f32 %v1451, %v1570
      %v1572 = vpop.f32.mrb[0].mxu0
      %1573 = vmatprep.mubr.f32.mxu0 0.0
      %v1574 = vand.u32 %v1200, 4294901760
      %v1575 = vsub.f32 %v1200, %v1574
      %1576 = vmatmul.mubr.f32.gmra.mrb[0].mxu0 %v1575
      %v1577 = vpop.f32.mrb[0].mxu0
      %v1578 = vadd.f32 %v1457, %v1577
      %v1579 = vpop.f32.mrb[0].mxu0
      %1580 = vmatprep.mubr.f32.mxu0 0.0
      %v1581 = vand.u32 %v1203, 4294901760
      %v1582 = vsub.f32 %v1203, %v1581
      %1583 = vmatmul.mubr.f32.gmra.mrb[0].mxu0 %v1582
      %v1584 = vpop.f32.mrb[0].mxu0
      %v1585 = vadd.f32 %v1463, %v1584
      %v1586 = vpop.f32.mrb[0].mxu0
      %1587 = vmatprep.mubr.f32.mxu0 0.0
      %v1588 = vand.u32 %v1206, 4294901760
      %v1589 = vsub.f32 %v1206, %v1588
      %1590 = vmatmul.mubr.f32.gmra.mrb[0].mxu0 %v1589
      %v1591 = vpop.f32.mrb[0].mxu0
      %v1592 = vadd.f32 %v1469, %v1591
      %v1593 = vpop.f32.mrb[0].mxu0
      %1594 = vdwg.mxu0
      %1595 = vmatprep.subr.mxu0 0.0
      %v1596 = vand.u32 %v410, 4294901760
      %1597 = vmatpush1.msra.mxu0 %v1596
      %1598 = vmatprep.subr.mxu0 0.0
      %1599 = vmatpush1.msra.mxu0 0.0
      %1600 = vmatprep.subr.mxu0 0.0
      %1601 = vmatpush1.msra.mxu0 0.0
      %1602 = vmatprep.subr.mxu0 0.0
      %1603 = vmatpush1.msra.mxu0 0.0
      %1604 = vmatprep.subr.mxu0 0.0
      %1605 = vmatpush1.msra.mxu0 0.0
      %1606 = vmatprep.subr.mxu0 0.0
      %1607 = vmatpush1.msra.mxu0 0.0
      %1608 = vmatprep.subr.mxu0 0.0
      %1609 = vmatpush1.msra.mxu0 0.0
      %1610 = vmatprep.subr.mxu0 0.0
      %1611 = vmatpush1.msra.mxu0 0.0
      %1612 = vmatprep.subr.mxu0 0.0
      %1613 = vmatpush1.msra.mxu0 0.0
      %1614 = vmatprep.subr.mxu0 0.0
      %1615 = vmatpush1.msra.mxu0 0.0
      %1616 = vmatprep.subr.mxu0 0.0
      %1617 = vmatpush1.msra.mxu0 0.0
      %1618 = vmatprep.subr.mxu0 0.0
      %1619 = vmatpush1.msra.mxu0 0.0
      %1620 = vmatprep.subr.mxu0 0.0
      %1621 = vmatpush1.msra.mxu0 0.0
      %1622 = vmatprep.subr.mxu0 0.0
      %1623 = vmatpush1.msra.mxu0 0.0
      %1624 = vmatprep.subr.mxu0 0.0
      %1625 = vmatpush1.msra.mxu0 0.0
      %1626 = vmatprep.subr.mxu0 0.0
      %1627 = vmatpush1.msra.mxu0 0.0
      %1628 = vmatprep.subr.mxu0 0.0
      %1629 = vmatpush1.msra.mxu0 0.0
      %1630 = vmatprep.subr.mxu0 0.0
      %1631 = vmatpush1.msra.mxu0 0.0
      %1632 = vmatprep.subr.mxu0 0.0
      %1633 = vmatpush1.msra.mxu0 0.0
      %1634 = vmatprep.subr.mxu0 0.0
      %1635 = vmatpush1.msra.mxu0 0.0
      %1636 = vmatprep.subr.mxu0 0.0
      %1637 = vmatpush1.msra.mxu0 0.0
      %1638 = vmatprep.subr.mxu0 0.0
      %1639 = vmatpush1.msra.mxu0 0.0
      %1640 = vmatprep.subr.mxu0 0.0
      %1641 = vmatpush1.msra.mxu0 0.0
      %1642 = vmatprep.subr.mxu0 0.0
      %1643 = vmatpush1.msra.mxu0 0.0
      %1644 = vmatprep.subr.mxu0 0.0
      %1645 = vmatpush1.msra.mxu0 0.0
      %1646 = vmatprep.subr.mxu0 0.0
      %1647 = vmatpush1.msra.mxu0 0.0
      %1648 = vmatprep.subr.mxu0 0.0
      %1649 = vmatpush1.msra.mxu0 0.0
      %1650 = vmatprep.subr.mxu0 0.0
      %1651 = vmatpush1.msra.mxu0 0.0
      %1652 = vmatprep.subr.mxu0 0.0
      %1653 = vmatpush1.msra.mxu0 0.0
      %1654 = vmatprep.subr.mxu0 0.0
      %1655 = vmatpush1.msra.mxu0 0.0
      %1656 = vmatprep.subr.mxu0 0.0
      %1657 = vmatpush1.msra.mxu0 0.0
      %1658 = vmatprep.subr.mxu0 0.0
      %1659 = vmatpush1.msra.mxu0 0.0
      %1660 = vmatprep.mubr.f32.mxu0 0.0
      %v1661 = vand.u32 %v1185, 4294901760
      %v1662 = vsub.f32 %v1185, %v1661
      %v1663 = vand.u32 %v1662, 4294901760
      %1664 = vmatmul.mubr.f32.gmra.mrb[0].mxu0 %v1663
      %v1665 = vpop.f32.mrb[0].mxu0
      %v1666 = vadd.f32 %v1543, %v1665
      %v1667 = vpop.f32.mrb[0].mxu0
      %1668 = vmatprep.mubr.f32.mxu0 0.0
      %v1669 = vand.u32 %v1188, 4294901760
      %v1670 = vsub.f32 %v1188, %v1669
      %v1671 = vand.u32 %v1670, 4294901760
      %1672 = vmatmul.mubr.f32.gmra.mrb[0].mxu0 %v1671
      %v1673 = vpop.f32.mrb[0].mxu0
      %v1674 = vadd.f32 %v1550, %v1673
      %v1675 = vpop.f32.mrb[0].mxu0
      %1676 = vmatprep.mubr.f32.mxu0 0.0
      %v1677 = vand.u32 %v1191, 4294901760
      %v1678 = vsub.f32 %v1191, %v1677
      %v1679 = vand.u32 %v1678, 4294901760
      %1680 = vmatmul.mubr.f32.gmra.mrb[0].mxu0 %v1679
      %v1681 = vpop.f32.mrb[0].mxu0
      %v1682 = vadd.f32 %v1557, %v1681
      %v1683 = vpop.f32.mrb[0].mxu0
      %1684 = vmatprep.mubr.f32.mxu0 0.0
      %v1685 = vand.u32 %v1194, 4294901760
      %v1686 = vsub.f32 %v1194, %v1685
      %v1687 = vand.u32 %v1686, 4294901760
      %1688 = vmatmul.mubr.f32.gmra.mrb[0].mxu0 %v1687
      %v1689 = vpop.f32.mrb[0].mxu0
      %v1690 = vadd.f32 %v1564, %v1689
      %v1691 = vpop.f32.mrb[0].mxu0
      %1692 = vmatprep.mubr.f32.mxu0 0.0
      %v1693 = vand.u32 %v1197, 4294901760
      %v1694 = vsub.f32 %v1197, %v1693
      %v1695 = vand.u32 %v1694, 4294901760
      %1696 = vmatmul.mubr.f32.gmra.mrb[0].mxu0 %v1695
      %v1697 = vpop.f32.mrb[0].mxu0
      %v1698 = vadd.f32 %v1571, %v1697
      %v1699 = vpop.f32.mrb[0].mxu0
      %1700 = vmatprep.mubr.f32.mxu0 0.0
      %v1701 = vand.u32 %v1200, 4294901760
      %v1702 = vsub.f32 %v1200, %v1701
      %v1703 = vand.u32 %v1702, 4294901760
      %1704 = vmatmul.mubr.f32.gmra.mrb[0].mxu0 %v1703
      %v1705 = vpop.f32.mrb[0].mxu0
      %v1706 = vadd.f32 %v1578, %v1705
      %v1707 = vpop.f32.mrb[0].mxu0
      %1708 = vmatprep.mubr.f32.mxu0 0.0
      %v1709 = vand.u32 %v1203, 4294901760
      %v1710 = vsub.f32 %v1203, %v1709
      %v1711 = vand.u32 %v1710, 4294901760
      %1712 = vmatmul.mubr.f32.gmra.mrb[0].mxu0 %v1711
      %v1713 = vpop.f32.mrb[0].mxu0
      %v1714 = vadd.f32 %v1585, %v1713
      %v1715 = vpop.f32.mrb[0].mxu0
      %1716 = vmatprep.mubr.f32.mxu0 0.0
      %v1717 = vand.u32 %v1206, 4294901760
      %v1718 = vsub.f32 %v1206, %v1717
      %v1719 = vand.u32 %v1718, 4294901760
      %1720 = vmatmul.mubr.f32.gmra.mrb[0].mxu0 %v1719
      %v1721 = vpop.f32.mrb[0].mxu0
      %v1722 = vadd.f32 %v1592, %v1721
      %v1723 = vpop.f32.mrb[0].mxu0
      %1724 = vdwg.mxu0
      %1725 = vmatprep.subr.mxu0 0.0
      %v1726 = vand.u32 %v410, 4294901760
      %v1727 = vsub.f32 %v410, %v1726
      %v1728 = vand.u32 %v1727, 4294901760
      %1729 = vmatpush1.msra.mxu0 %v1728
      %1730 = vmatprep.subr.mxu0 0.0
      %1731 = vmatpush1.msra.mxu0 0.0
      %1732 = vmatprep.subr.mxu0 0.0
      %1733 = vmatpush1.msra.mxu0 0.0
      %1734 = vmatprep.subr.mxu0 0.0
      %1735 = vmatpush1.msra.mxu0 0.0
      %1736 = vmatprep.subr.mxu0 0.0
      %1737 = vmatpush1.msra.mxu0 0.0
      %1738 = vmatprep.subr.mxu0 0.0
      %1739 = vmatpush1.msra.mxu0 0.0
      %1740 = vmatprep.subr.mxu0 0.0
      %1741 = vmatpush1.msra.mxu0 0.0
      %1742 = vmatprep.subr.mxu0 0.0
      %1743 = vmatpush1.msra.mxu0 0.0
      %1744 = vmatprep.subr.mxu0 0.0
      %1745 = vmatpush1.msra.mxu0 0.0
      %1746 = vmatprep.subr.mxu0 0.0
      %1747 = vmatpush1.msra.mxu0 0.0
      %1748 = vmatprep.subr.mxu0 0.0
      %1749 = vmatpush1.msra.mxu0 0.0
      %1750 = vmatprep.subr.mxu0 0.0
      %1751 = vmatpush1.msra.mxu0 0.0
      %1752 = vmatprep.subr.mxu0 0.0
      %1753 = vmatpush1.msra.mxu0 0.0
      %1754 = vmatprep.subr.mxu0 0.0
      %1755 = vmatpush1.msra.mxu0 0.0
      %1756 = vmatprep.subr.mxu0 0.0
      %1757 = vmatpush1.msra.mxu0 0.0
      %1758 = vmatprep.subr.mxu0 0.0
      %1759 = vmatpush1.msra.mxu0 0.0
      %1760 = vmatprep.subr.mxu0 0.0
      %1761 = vmatpush1.msra.mxu0 0.0
      %1762 = vmatprep.subr.mxu0 0.0
      %1763 = vmatpush1.msra.mxu0 0.0
      %1764 = vmatprep.subr.mxu0 0.0
      %1765 = vmatpush1.msra.mxu0 0.0
      %1766 = vmatprep.subr.mxu0 0.0
      %1767 = vmatpush1.msra.mxu0 0.0
      %1768 = vmatprep.subr.mxu0 0.0
      %1769 = vmatpush1.msra.mxu0 0.0
      %1770 = vmatprep.subr.mxu0 0.0
      %1771 = vmatpush1.msra.mxu0 0.0
      %1772 = vmatprep.subr.mxu0 0.0
      %1773 = vmatpush1.msra.mxu0 0.0
      %1774 = vmatprep.subr.mxu0 0.0
      %1775 = vmatpush1.msra.mxu0 0.0
      %1776 = vmatprep.subr.mxu0 0.0
      %1777 = vmatpush1.msra.mxu0 0.0
      %1778 = vmatprep.subr.mxu0 0.0
      %1779 = vmatpush1.msra.mxu0 0.0
      %1780 = vmatprep.subr.mxu0 0.0
      %1781 = vmatpush1.msra.mxu0 0.0
      %1782 = vmatprep.subr.mxu0 0.0
      %1783 = vmatpush1.msra.mxu0 0.0
      %1784 = vmatprep.subr.mxu0 0.0
      %1785 = vmatpush1.msra.mxu0 0.0
      %1786 = vmatprep.subr.mxu0 0.0
      %1787 = vmatpush1.msra.mxu0 0.0
      %1788 = vmatprep.subr.mxu0 0.0
      %1789 = vmatpush1.msra.mxu0 0.0
      %1790 = vmatprep.subr.mxu0 0.0
      %1791 = vmatpush1.msra.mxu0 0.0
      %1792 = vmatprep.mubr.f32.mxu0 0.0
      %v1793 = vand.u32 %v1185, 4294901760
      %1794 = vmatmul.mubr.f32.gmra.mrb[0].mxu0 %v1793
      %v1795 = vpop.f32.mrb[0].mxu0
      %v1796 = vadd.f32 %v1666, %v1795
      %v1797 = vpop.f32.mrb[0].mxu0
      %1798 = vmatprep.mubr.f32.mxu0 0.0
      %v1799 = vand.u32 %v1188, 4294901760
      %1800 = vmatmul.mubr.f32.gmra.mrb[0].mxu0 %v1799
      %v1801 = vpop.f32.mrb[0].mxu0
      %v1802 = vadd.f32 %v1674, %v1801
      %v1803 = vpop.f32.mrb[0].mxu0
      %1804 = vmatprep.mubr.f32.mxu0 0.0
      %v1805 = vand.u32 %v1191, 4294901760
      %1806 = vmatmul.mubr.f32.gmra.mrb[0].mxu0 %v1805
      %v1807 = vpop.f32.mrb[0].mxu0
      %v1808 = vadd.f32 %v1682, %v1807
      %v1809 = vpop.f32.mrb[0].mxu0
      %1810 = vmatprep.mubr.f32.mxu0 0.0
      %v1811 = vand.u32 %v1194, 4294901760
      %1812 = vmatmul.mubr.f32.gmra.mrb[0].mxu0 %v1811
      %v1813 = vpop.f32.mrb[0].mxu0
      %v1814 = vadd.f32 %v1690, %v1813
      %v1815 = vpop.f32.mrb[0].mxu0
      %1816 = vmatprep.mubr.f32.mxu0 0.0
      %v1817 = vand.u32 %v1197, 4294901760
      %1818 = vmatmul.mubr.f32.gmra.mrb[0].mxu0 %v1817
      %v1819 = vpop.f32.mrb[0].mxu0
      %v1820 = vadd.f32 %v1698, %v1819
      %v1821 = vpop.f32.mrb[0].mxu0
      %1822 = vmatprep.mubr.f32.mxu0 0.0
      %v1823 = vand.u32 %v1200, 4294901760
      %1824 = vmatmul.mubr.f32.gmra.mrb[0].mxu0 %v1823
      %v1825 = vpop.f32.mrb[0].mxu0
      %v1826 = vadd.f32 %v1706, %v1825
      %v1827 = vpop.f32.mrb[0].mxu0
      %1828 = vmatprep.mubr.f32.mxu0 0.0
      %v1829 = vand.u32 %v1203, 4294901760
      %1830 = vmatmul.mubr.f32.gmra.mrb[0].mxu0 %v1829
      %v1831 = vpop.f32.mrb[0].mxu0
      %v1832 = vadd.f32 %v1714, %v1831
      %v1833 = vpop.f32.mrb[0].mxu0
      %1834 = vmatprep.mubr.f32.mxu0 0.0
      %v1835 = vand.u32 %v1206, 4294901760
      %1836 = vmatmul.mubr.f32.gmra.mrb[0].mxu0 %v1835
      %v1837 = vpop.f32.mrb[0].mxu0
      %v1838 = vadd.f32 %v1722, %v1837
      %v1839 = vpop.f32.mrb[0].mxu0
      %1840 = vdwg.mxu0
      %1841 = vmatprep.subr.mxu0 0.0
      %v1842 = vand.u32 %v410, 4294901760
      %1843 = vmatpush1.msra.mxu0 %v1842
      %1844 = vmatprep.subr.mxu0 0.0
      %1845 = vmatpush1.msra.mxu0 0.0
      %1846 = vmatprep.subr.mxu0 0.0
      %1847 = vmatpush1.msra.mxu0 0.0
      %1848 = vmatprep.subr.mxu0 0.0
      %1849 = vmatpush1.msra.mxu0 0.0
      %1850 = vmatprep.subr.mxu0 0.0
      %1851 = vmatpush1.msra.mxu0 0.0
      %1852 = vmatprep.subr.mxu0 0.0
      %1853 = vmatpush1.msra.mxu0 0.0
      %1854 = vmatprep.subr.mxu0 0.0
      %1855 = vmatpush1.msra.mxu0 0.0
      %1856 = vmatprep.subr.mxu0 0.0
      %1857 = vmatpush1.msra.mxu0 0.0
      %1858 = vmatprep.subr.mxu0 0.0
      %1859 = vmatpush1.msra.mxu0 0.0
      %1860 = vmatprep.subr.mxu0 0.0
      %1861 = vmatpush1.msra.mxu0 0.0
      %1862 = vmatprep.subr.mxu0 0.0
      %1863 = vmatpush1.msra.mxu0 0.0
      %1864 = vmatprep.subr.mxu0 0.0
      %1865 = vmatpush1.msra.mxu0 0.0
      %1866 = vmatprep.subr.mxu0 0.0
      %1867 = vmatpush1.msra.mxu0 0.0
      %1868 = vmatprep.subr.mxu0 0.0
      %1869 = vmatpush1.msra.mxu0 0.0
      %1870 = vmatprep.subr.mxu0 0.0
      %1871 = vmatpush1.msra.mxu0 0.0
      %1872 = vmatprep.subr.mxu0 0.0
      %1873 = vmatpush1.msra.mxu0 0.0
      %1874 = vmatprep.subr.mxu0 0.0
      %1875 = vmatpush1.msra.mxu0 0.0
      %1876 = vmatprep.subr.mxu0 0.0
      %1877 = vmatpush1.msra.mxu0 0.0
      %1878 = vmatprep.subr.mxu0 0.0
      %1879 = vmatpush1.msra.mxu0 0.0
      %1880 = vmatprep.subr.mxu0 0.0
      %1881 = vmatpush1.msra.mxu0 0.0
      %1882 = vmatprep.subr.mxu0 0.0
      %1883 = vmatpush1.msra.mxu0 0.0
      %1884 = vmatprep.subr.mxu0 0.0
      %1885 = vmatpush1.msra.mxu0 0.0
      %1886 = vmatprep.subr.mxu0 0.0
      %1887 = vmatpush1.msra.mxu0 0.0
      %1888 = vmatprep.subr.mxu0 0.0
      %1889 = vmatpush1.msra.mxu0 0.0
      %1890 = vmatprep.subr.mxu0 0.0
      %1891 = vmatpush1.msra.mxu0 0.0
      %1892 = vmatprep.subr.mxu0 0.0
      %1893 = vmatpush1.msra.mxu0 0.0
      %1894 = vmatprep.subr.mxu0 0.0
      %1895 = vmatpush1.msra.mxu0 0.0
      %1896 = vmatprep.subr.mxu0 0.0
      %1897 = vmatpush1.msra.mxu0 0.0
      %1898 = vmatprep.subr.mxu0 0.0
      %1899 = vmatpush1.msra.mxu0 0.0
      %1900 = vmatprep.subr.mxu0 0.0
      %1901 = vmatpush1.msra.mxu0 0.0
      %1902 = vmatprep.subr.mxu0 0.0
      %1903 = vmatpush1.msra.mxu0 0.0
      %1904 = vmatprep.subr.mxu0 0.0
      %1905 = vmatpush1.msra.mxu0 0.0
      %1906 = vmatprep.mubr.f32.mxu0 0.0
      %v1907 = vand.u32 %v1185, 4294901760
      %1908 = vmatmul.mubr.f32.gmra.mrb[0].mxu0 %v1907
      %v1909 = vpop.f32.mrb[0].mxu0
      %v1910 = vadd.f32 %v1796, %v1909
      %v1911 = vpop.f32.mrb[0].mxu0
      %1912 = vmatprep.mubr.f32.mxu0 0.0
      %v1913 = vand.u32 %v1188, 4294901760
      %1914 = vmatmul.mubr.f32.gmra.mrb[0].mxu0 %v1913
      %v1915 = vpop.f32.mrb[0].mxu0
      %v1916 = vadd.f32 %v1802, %v1915
      %v1917 = vpop.f32.mrb[0].mxu0
      %1918 = vmatprep.mubr.f32.mxu0 0.0
      %v1919 = vand.u32 %v1191, 4294901760
      %1920 = vmatmul.mubr.f32.gmra.mrb[0].mxu0 %v1919
      %v1921 = vpop.f32.mrb[0].mxu0
      %v1922 = vadd.f32 %v1808, %v1921
      %v1923 = vpop.f32.mrb[0].mxu0
      %1924 = vmatprep.mubr.f32.mxu0 0.0
      %v1925 = vand.u32 %v1194, 4294901760
      %1926 = vmatmul.mubr.f32.gmra.mrb[0].mxu0 %v1925
      %v1927 = vpop.f32.mrb[0].mxu0
      %v1928 = vadd.f32 %v1814, %v1927
      %v1929 = vpop.f32.mrb[0].mxu0
      %1930 = vmatprep.mubr.f32.mxu0 0.0
      %v1931 = vand.u32 %v1197, 4294901760
      %1932 = vmatmul.mubr.f32.gmra.mrb[0].mxu0 %v1931
      %v1933 = vpop.f32.mrb[0].mxu0
      %v1934 = vadd.f32 %v1820, %v1933
      %v1935 = vpop.f32.mrb[0].mxu0
      %1936 = vmatprep.mubr.f32.mxu0 0.0
      %v1937 = vand.u32 %v1200, 4294901760
      %1938 = vmatmul.mubr.f32.gmra.mrb[0].mxu0 %v1937
      %v1939 = vpop.f32.mrb[0].mxu0
      %v1940 = vadd.f32 %v1826, %v1939
      %v1941 = vpop.f32.mrb[0].mxu0
      %1942 = vmatprep.mubr.f32.mxu0 0.0
      %v1943 = vand.u32 %v1203, 4294901760
      %1944 = vmatmul.mubr.f32.gmra.mrb[0].mxu0 %v1943
      %v1945 = vpop.f32.mrb[0].mxu0
      %v1946 = vadd.f32 %v1832, %v1945
      %v1947 = vpop.f32.mrb[0].mxu0
      %1948 = vmatprep.mubr.f32.mxu0 0.0
      %v1949 = vand.u32 %v1206, 4294901760
      %1950 = vmatmul.mubr.f32.gmra.mrb[0].mxu0 %v1949
      %v1951 = vpop.f32.mrb[0].mxu0
      %v1952 = vadd.f32 %v1838, %v1951
      %v1953 = vpop.f32.mrb[0].mxu0
      %1954 = vdwg.mxu0
      %v1955 = vld [vmem:[%s2] sm:$0x1]
      %v1957 = vlaneseq
      %v1958 = vshrl.u32 %v1957, 7
      %v1959 = vsub.s32 0, %v1958
      %v1960 = vrot.slane %v1955, %v1959
      %v1962 = vadd.f32 %v1910, %v1960
      %v1963 = vadd.f32 %v1916, %v1960
      %v1964 = vadd.f32 %v1922, %v1960
      %v1965 = vadd.f32 %v1928, %v1960
      %v1966 = vadd.f32 %v1934, %v1960
      %v1967 = vadd.f32 %v1940, %v1960
      %v1968 = vadd.f32 %v1946, %v1960
      %v1969 = vadd.f32 %v1952, %v1960
      %1970 = vst.msk [vmem:[%s175] sm:$0xff] %vm193, %v1962
      %1971 = vst.msk [vmem:[%s175 + $0x8] sm:$0xff] %vm193, %v1963
      %1972 = vst.msk [vmem:[%s175 + $0x10] sm:$0xff] %vm193, %v1964
      %1973 = vst.msk [vmem:[%s175 + $0x18] sm:$0xff] %vm193, %v1965
      %1974 = vst.msk [vmem:[%s175 + $0x20] sm:$0xff] %vm193, %v1966
      %1975 = vst.msk [vmem:[%s175 + $0x28] sm:$0xff] %vm193, %v1967
      %1976 = vst.msk [vmem:[%s175 + $0x30] sm:$0xff] %vm193, %v1968
      %1977 = vst.msk [vmem:[%s175 + $0x38] sm:$0xff] %vm193, %v1969
      %s1978 = smul.u32 8, %s14
      %p1979 = scmp.lt.s32.totalorder %s1978, 31
      %s1980 = scalar_select %p1979, %s1978, 31
      %s1981 = smul.addr %s1980, 8
      %s1982 = scalar_lea.vmem %s3, %s1981
      // Predicated region
      $region33: #{patch_merge_forward.1} parent=31 // pred_check
        %p1983 = pneg %p100
      $region34: #{patch_merge_forward.1} parent=31 // pred_check_branch
        %1985 = sbr.rel (%p1983) target = $region36
      $region35: #{patch_merge_forward.1} parent=31 // pred_region
        %s1986 = smul.u32 8, %s14
      $region36: #{patch_merge_forward.1} parent=31 // pred_fallthru
        _
    $region32: #{patch_merge_forward.1} parent=5 // pred_fallthru
      _
    %p1987 = scmp.le.s32.totalorder 2, %s9
    // Predicated region
    $region37: #{patch_merge_forward.1} parent=5 // pred_check
      %p1988 = pneg %p1987
    $region38: #{patch_merge_forward.1} parent=5 // pred_check_branch
      %1990 = sbr.rel (%p1988) target = $region40
    $region39: #{patch_merge_forward.1} parent=5 // pred_region
      %s1991 = ssub.s32 %s9, 2
      // Predicated region
      $region41: #{patch_merge_forward.1} parent=39 // pred_check
        %p1992 = pneg %p106
      $region42: #{patch_merge_forward.1} parent=39 // pred_check_branch
        %1994 = sbr.rel (%p1992) target = $region44
      $region43: #{patch_merge_forward.1} parent=39 // pred_region
        %s1995 = smul.u32 8, %s15
        %p1996 = scmp.lt.s32.totalorder %s1995, 31
        %s1997 = scalar_select %p1996, %s1995, 31
        %s1998 = smul.addr %s1997, 8
        %s1999 = scalar_lea.vmem %s3, %s1998
      $region44: #{patch_merge_forward.1} parent=39 // pred_fallthru
        _
    $region40: #{patch_merge_forward.1} parent=5 // pred_fallthru
      _
  $region6: #{patch_merge_forward.1} parent=0 // loop_footer
    %s13 = sadd.s32 1, %s9
  $region7: #{patch_merge_forward.1} parent=0 // loop_footer_branch
    %8 = sbr.rel target = $region3
  $region8: #{patch_merge_forward.1} parent=0 // loop_exit
    _

</llo_original>
